<compile_context>
chip_gen: v7x
topology: tpu7x:2x2x1
jax: 0.10.0
libtpu: 0.0.40
codegen_flags: <defaults>
</compile_context>

<pallas_src>
import numpy as np
import jax
import jax.numpy as jnp
from jax import lax
from jax.experimental import pallas as pl
from jax.experimental.pallas import tpu as pltpu


# ----------------------------------------------------------------------------
# Fused Bridge kernel
# ----------------------------------------------------------------------------
def _make_bridge_kernel(NB, H, W, Cin, Cout):
    WCi, WCo = W * Cin, W * Cout
    STRIDE = H + 1              # rows per image incl. the shared separator row
    R = NB * STRIDE + 1         # total scratch rows (incl. top & bottom halo)
    M = R - 2                   # matmul M = NB*(H+1) - 1

    def kernel(x_ref, b0_ref, b1_ref, b2_ref, b3_ref, bias_ref,
               o_ref, xp0, work):
        # x_ref   : (NB, H, W*Cin)  f32    lane-dense input slab
        # bK_ref  : (3, W*Cin_s, W*Cout) bf16  banded per-dy weights (BN scale folded)
        # bias_ref: (4, W*Cout)     f32    folded BN bias, tiled over W
        # o_ref   : (NB, H, W*Cout) f32
        # xp0     : VMEM (R, W*Cin)  bf16  row-padded stage-0 input
        # work    : VMEM (R, W*Cout) bf16  row-padded inter-stage activation

        # Zero only the NB+1 halo/separator rows (rows nb*(H+1)).  Done every
        # grid step (cheap) so correctness does not rely on scratch persistence
        # when the "parallel" axis is sharded across TensorCores.
        zi = jnp.zeros((1, WCi), xp0.dtype)
        zo = jnp.zeros((1, WCo), work.dtype)
        for nb in range(NB + 1):
            r = nb * STRIDE
            xp0[r:r + 1, :] = zi
            work[r:r + 1, :] = zo

        # Stage-0 input: image nb occupies rows nb*(H+1)+1 .. nb*(H+1)+H.
        # Single cast per image here (bf16 scratch) instead of per-dy casts.
        for nb in range(NB):
            r0 = nb * STRIDE + 1
            xp0[r0:r0 + H, :] = x_ref[nb].astype(xp0.dtype)

        def conv_stage(src_ref, b_ref, s_idx):
            # One MXU matmul per kernel row dy; K = W*Cin_stage, M = NB*(H+1)-1.
            acc = jnp.zeros((M, WCo), jnp.float32)
            for dy in range(3):
                acc = acc + jnp.dot(src_ref[dy:dy + M, :], b_ref[dy],
                                    preferred_element_type=jnp.float32)
            bias = bias_ref[s_idx:s_idx + 1, :]          # (1, W*Cout) f32
            return jnp.maximum(acc + bias, 0.0)          # (M, W*Cout) f32

        def store_stage(y):
            # Full-slab store, then re-zero the NB-1 interior separator rows
            # that picked up cross-image garbage (they must stay zero halos).
            work[1:1 + M, :] = y.astype(work.dtype)
            for nb in range(1, NB):
                r = nb * STRIDE
                work[r:r + 1, :] = zo

        y = conv_stage(xp0, b0_ref, 0)    # Cin  -> Cout
        store_stage(y)
        y = conv_stage(work, b1_ref, 1)   # Cout -> Cout
        store_stage(y)
        y = conv_stage(work, b2_ref, 2)   # Cout -> Cout
        store_stage(y)
        y = conv_stage(work, b3_ref, 3)   # Cout -> Cout
        for nb in range(NB):              # lane-dense (128-wide) output stores
            a0 = nb * STRIDE
            o_ref[nb] = y[a0:a0 + H, :].astype(o_ref.dtype)

    return kernel, R


def _band_weight(w_hwio, bn_scale, W):
    """(3,3,Cin,Cout) conv weight -> banded (3, W*Cin, W*Cout) bf16 matrices,
    with the per-output-channel BN scale folded into the columns (in f32,
    before the single bf16 cast).

    B[dy, wp*Cin+ci, w*Cout+co] = w[dy, wp-w+1, ci, co] * scale[co]
    for wp-w+1 in {0,1,2}; out-of-range wp dropped (folds left/right padding).

    Scaling note: this banded trick is the right trade while W*Cin fits one
    MXU tile (<=128 on v5e, <=256 on v6e/v7x); past that, switch to per-dx
    matmuls with K = 3*Cin (or tile W) rather than dense passes over mostly
    zero K.
    """
    kh, kw, Cin, Cout = w_hwio.shape
    w_np = np.asarray(w_hwio, dtype=np.float32)
    s_np = np.asarray(bn_scale, dtype=np.float32)
    B = np.zeros((kh, W * Cin, W * Cout), np.float32)
    for dy in range(kh):
        for w in range(W):
            for dx in range(kw):
                wp = w + dx - 1
                if 0 <= wp < W:
                    B[dy, wp * Cin:(wp + 1) * Cin, w * Cout:(w + 1) * Cout] = (
                        w_np[dy, dx] * s_np[None, :])
    return jnp.asarray(B, dtype=jnp.bfloat16)


def prepare_bridge_pallas_params(params, W):
    banded = [_band_weight(w, s, W) for (w, s, _) in params]
    biases = jnp.stack([jnp.tile(b, W) for (_, _, b) in params]).astype(jnp.float32)
    return banded, biases


def _choose_num_batched(N, H):
    # Target M ~= NB*H >= 128 MXU rows, but keep at least 2 grid steps so the
    # 'parallel' grid axis can still shard across TensorCores (v7x / v5p).
    nb_target = max(1, (128 + H - 1) // H)
    if N >= 2 * nb_target:
        return nb_target
    return max(1, N // 2)


def bridge_forward_pallas_lane_dense(x_lane, params):
    """Core entry: lane-dense (N, H, W*Cin) f32 in -> (N, H, W*Cout) f32 out.

    Production callers should keep activations in this layout across layers
    (avoids NCHW<->NHWC HBM round trips per Bridge call).
    """
    N, H, WCi = x_lane.shape
    Cin = params[0][0].shape[-2]
    Cout = params[0][0].shape[-1]
    W = WCi // Cin
    WCo = W * Cout

    banded, biases = prepare_bridge_pallas_params(params, W)
    b0, b1, b2, b3 = banded

    NB = _choose_num_batched(N, H)
    G = (N + NB - 1) // NB
    N_pad = G * NB
    if N_pad != N:
        x_lane = jnp.concatenate(
            [x_lane, jnp.zeros((N_pad - N, H, WCi), x_lane.dtype)], axis=0)

    kernel, R = _make_bridge_kernel(NB, H, W, Cin, Cout)
    out = pl.pallas_call(
        kernel,
        out_shape=jax.ShapeDtypeStruct((N_pad, H, WCo), jnp.float32),
        grid_spec=pltpu.PrefetchScalarGridSpec(
            num_scalar_prefetch=0,
            grid=(G,),
            in_specs=[
                pl.BlockSpec((NB, H, WCi), lambda n: (n, 0, 0)),
                # Constant index_maps: Pallas does not re-DMA these per step.
                pl.BlockSpec(b0.shape, lambda n: (0, 0, 0)),
                pl.BlockSpec(b1.shape, lambda n: (0, 0, 0)),
                pl.BlockSpec(b2.shape, lambda n: (0, 0, 0)),
                pl.BlockSpec(b3.shape, lambda n: (0, 0, 0)),
                pl.BlockSpec(biases.shape, lambda n: (0, 0)),
            ],
            out_specs=pl.BlockSpec((NB, H, WCo), lambda n: (n, 0, 0)),
            scratch_shapes=[
                pltpu.VMEM((R, WCi), jnp.bfloat16),   # padded stage-0 input
                pltpu.VMEM((R, WCo), jnp.bfloat16),   # padded inter-stage act
            ],
        ),
        compiler_params=pltpu.CompilerParams(
            dimension_semantics=("parallel",),
            vmem_limit_bytes=32 * 1024 * 1024,   # safe on v7x's 64 MiB VMEM
        ),
    )(x_lane, b0, b1, b2, b3, biases)
    return out[:N] if N_pad != N else out


def bridge_forward_pallas(x_nchw, params):
    """Matches Bridge.forward: NCHW in, NCHW out (transposes only for the
    standalone test; fuse/keep lane-dense layout in a real pipeline)."""
    N, Cin, H, W = x_nchw.shape
    Cout = params[0][0].shape[-1]
    x = jnp.transpose(x_nchw, (0, 2, 3, 1)).reshape(N, H, W * Cin)
    x = x.astype(jnp.float32)
    out = bridge_forward_pallas_lane_dense(x, params)
    out = out.reshape(N, H, W, Cout)
    return jnp.transpose(out, (0, 3, 1, 2))  # NHWC -> NCHW


# ----------------------------------------------------------------------------
# Parameters (conv + folded inference-mode BN)
# ----------------------------------------------------------------------------
def init_conv_bn_params(key, in_c, out_c):
    k1, k2, k3, k4 = jax.random.split(key, 4)
    # PyTorch conv weight (out_c, in_c, 3, 3) -> HWIO (3, 3, in_c, out_c)
    w_oihw = 0.1 * jax.random.normal(k1, (out_c, in_c, 3, 3), jnp.float32)
    w_hwio = jnp.transpose(w_oihw, (2, 3, 1, 0))
    conv_b = 0.1 * jax.random.normal(k2, (out_c,), jnp.float32)
    gamma = 1.0 + 0.1 * jax.random.normal(k3, (out_c,), jnp.float32)
    beta = 0.1 * jax.random.normal(k4, (out_c,), jnp.float32)
    running_mean = jnp.zeros((out_c,), jnp.float32)
    running_var = jnp.ones((out_c,), jnp.float32)
    eps = 1e-5
    # relu(conv(x) * scale + bias) == relu(BN(conv(x) + conv_b))
    scale = gamma / jnp.sqrt(running_var + eps)
    bias = (conv_b - running_mean) * scale + beta
    # Quantize conv weights to bf16 once, so kernel and reference share them.
    w_hwio = w_hwio.astype(jnp.bfloat16).astype(jnp.float32)
    return w_hwio, scale, bias


def init_bridge_params(key, in_channels, out_channels):
    keys = jax.random.split(key, 4)
    channel_plan = [(in_channels, out_channels),
                    (out_channels, out_channels),
                    (out_channels, out_channels),
                    (out_channels, out_channels)]
    return [init_conv_bn_params(k, ci, co)
            for k, (ci, co) in zip(keys, channel_plan)]


# ----------------------------------------------------------------------------
# Pure-JAX reference (same folded inference-mode BN)
# ----------------------------------------------------------------------------
def bridge_forward_ref(x_nchw, params):
    x = jnp.transpose(x_nchw, (0, 2, 3, 1))
    for (w_hwio, scale, bias) in params:
        y = lax.conv_general_dilated(
            x, w_hwio, window_strides=(1, 1), padding="SAME",
            dimension_numbers=("NHWC", "HWIO", "NHWC"))
        x = jnp.maximum(y * scale + bias, 0.0)
    return jnp.transpose(x, (0, 3, 1, 2))


if __name__ == "__main__":
    key = jax.random.PRNGKey(0)
    k_x, k_p, k_x2 = jax.random.split(key, 3)

    N, in_channels, out_channels, H, W = 2, 4, 8, 16, 16
    params = init_bridge_params(k_p, in_channels, out_channels)

    # Small module-consistent test (NB = 1, two grid steps).
    x = jax.random.normal(k_x, (N, in_channels, H, W), jnp.float32)  # NCHW
    out = jax.block_until_ready(bridge_forward_pallas(x, params))
    assert out.shape == (N, out_channels, H, W), out.shape
    assert bool(jnp.all(jnp.isfinite(out)))
    ref = jax.block_until_ready(bridge_forward_ref(x, params))
    err = float(jnp.max(jnp.abs(out - ref)))
    assert err < 1e-1, f"max abs error vs reference (N=2): {err}"

    # Also exercise the batched grid path (NB > 1, shared separator halos,
    # batch padding to a multiple of NB).
    N2 = 5
    x2 = jax.random.normal(k_x2, (N2, in_channels, H, W), jnp.float32)
    out2 = jax.block_until_ready(bridge_forward_pallas(x2, params))
    ref2 = jax.block_until_ready(bridge_forward_ref(x2, params))
    assert out2.shape == (N2, out_channels, H, W), out2.shape
    err2 = float(jnp.max(jnp.abs(out2 - ref2)))
    assert err2 < 1e-1, f"max abs error vs reference (N=5): {err2}"

    print("KERNEL_OK")
</pallas_src>

<mosaic_0001>
module attributes {stable_mosaic.version = 11 : i64} {
  func.func @kernel(%arg0: i32, %arg1: memref<1x16x64xf32, #tpu.memory_space<vmem>>, %arg2: memref<3x64x128xbf16, #tpu.memory_space<vmem>>, %arg3: memref<3x128x128xbf16, #tpu.memory_space<vmem>>, %arg4: memref<3x128x128xbf16, #tpu.memory_space<vmem>>, %arg5: memref<3x128x128xbf16, #tpu.memory_space<vmem>>, %arg6: memref<4x128xf32, #tpu.memory_space<vmem>>, %arg7: memref<1x16x128xf32, #tpu.memory_space<vmem>>, %arg8: memref<18x64xbf16, #tpu.memory_space<vmem>>, %arg9: memref<18x128xbf16, #tpu.memory_space<vmem>>) attributes {dimension_semantics = [#tpu.dimension_semantics<parallel>], iteration_bounds = array<i64: 2>, scalar_prefetch = 0 : i64, scratch_operands = 2 : i64, tpu.core_type = #tpu.core_type<tc>, window_params = [{transform_indices = @transform_0, window_bounds = array<i64: 1, 16, 64>}, {pipeline_mode = #tpu.pipeline_mode<synchronous>, transform_indices = @transform_1, window_bounds = array<i64: 3, 64, 128>}, {pipeline_mode = #tpu.pipeline_mode<synchronous>, transform_indices = @transform_2, window_bounds = array<i64: 3, 128, 128>}, {pipeline_mode = #tpu.pipeline_mode<synchronous>, transform_indices = @transform_3, window_bounds = array<i64: 3, 128, 128>}, {pipeline_mode = #tpu.pipeline_mode<synchronous>, transform_indices = @transform_4, window_bounds = array<i64: 3, 128, 128>}, {pipeline_mode = #tpu.pipeline_mode<synchronous>, transform_indices = @transform_5, window_bounds = array<i64: 4, 128>}, {transform_indices = @transform_6, window_bounds = array<i64: 1, 16, 128>}]} {
    %cst = arith.constant 0.000000e+00 : bf16
    %0 = vector.broadcast %cst : bf16 to vector<1x64xbf16>
    %cst_0 = arith.constant 0.000000e+00 : bf16
    %1 = vector.broadcast %cst_0 : bf16 to vector<1x128xbf16>
    %c0 = arith.constant 0 : index
    %c0_1 = arith.constant 0 : index
    %2 = vector.load %arg8[%c0, %c0_1] : memref<18x64xbf16, #tpu.memory_space<vmem>>, vector<1x64xbf16>
    tpu.vector_store %arg8[%c0, %c0_1], %0 {strides = array<i32>} : memref<18x64xbf16, #tpu.memory_space<vmem>>, vector<1x64xbf16>,
    %c0_2 = arith.constant 0 : index
    %c0_3 = arith.constant 0 : index
    %3 = vector.load %arg9[%c0_2, %c0_3] : memref<18x128xbf16, #tpu.memory_space<vmem>>, vector<1x128xbf16>
    tpu.vector_store %arg9[%c0_2, %c0_3], %1 {strides = array<i32>} : memref<18x128xbf16, #tpu.memory_space<vmem>>, vector<1x128xbf16>,
    %c17 = arith.constant 17 : index
    %c0_4 = arith.constant 0 : index
    %4 = vector.load %arg8[%c17, %c0_4] : memref<18x64xbf16, #tpu.memory_space<vmem>>, vector<1x64xbf16>
    tpu.vector_store %arg8[%c17, %c0_4], %0 {strides = array<i32>} : memref<18x64xbf16, #tpu.memory_space<vmem>>, vector<1x64xbf16>,
    %c17_5 = arith.constant 17 : index
    %c0_6 = arith.constant 0 : index
    %5 = vector.load %arg9[%c17_5, %c0_6] : memref<18x128xbf16, #tpu.memory_space<vmem>>, vector<1x128xbf16>
    tpu.vector_store %arg9[%c17_5, %c0_6], %1 {strides = array<i32>} : memref<18x128xbf16, #tpu.memory_space<vmem>>, vector<1x128xbf16>,
    %c0_7 = arith.constant 0 : index
    %c0_8 = arith.constant 0 : index
    %c0_9 = arith.constant 0 : index
    %6 = vector.load %arg1[%c0_7, %c0_8, %c0_9] : memref<1x16x64xf32, #tpu.memory_space<vmem>>, vector<1x16x64xf32>
    %7 = vector.shape_cast %6 : vector<1x16x64xf32> to vector<16x64xf32>
    %8 = arith.truncf %7 : vector<16x64xf32> to vector<16x64xbf16>
    %c1 = arith.constant 1 : index
    %c0_10 = arith.constant 0 : index
    %9 = vector.load %arg8[%c1, %c0_10] : memref<18x64xbf16, #tpu.memory_space<vmem>>, vector<16x64xbf16>
    tpu.vector_store %arg8[%c1, %c0_10], %8 {strides = array<i32>} : memref<18x64xbf16, #tpu.memory_space<vmem>>, vector<16x64xbf16>,
    %cst_11 = arith.constant 0.000000e+00 : f32
    %10 = vector.broadcast %cst_11 : f32 to vector<16x128xf32>
    %c0_12 = arith.constant 0 : index
    %c0_13 = arith.constant 0 : index
    %11 = vector.load %arg8[%c0_12, %c0_13] : memref<18x64xbf16, #tpu.memory_space<vmem>>, vector<16x64xbf16>
    %c0_14 = arith.constant 0 : index
    %c0_15 = arith.constant 0 : index
    %c0_16 = arith.constant 0 : index
    %12 = vector.load %arg2[%c0_14, %c0_15, %c0_16] : memref<3x64x128xbf16, #tpu.memory_space<vmem>>, vector<1x64x128xbf16>
    %13 = vector.shape_cast %12 : vector<1x64x128xbf16> to vector<64x128xbf16>
    %cst_17 = arith.constant dense<0.000000e+00> : vector<16x128xf32>
    %14 = tpu.matmul %11, %13, %cst_17 {dimension_numbers = #tpu.dot_dimension_numbers<[1], [0], [0], [1], [0, 0, 1, 1], [], []>} : vector<16x64xbf16>, vector<64x128xbf16>, vector<16x128xf32> -> vector<16x128xf32>
    %15 = arith.addf %10, %14 : vector<16x128xf32>
    %c1_18 = arith.constant 1 : index
    %c0_19 = arith.constant 0 : index
    %16 = vector.load %arg8[%c1_18, %c0_19] : memref<18x64xbf16, #tpu.memory_space<vmem>>, vector<16x64xbf16>
    %c1_20 = arith.constant 1 : index
    %c0_21 = arith.constant 0 : index
    %c0_22 = arith.constant 0 : index
    %17 = vector.load %arg2[%c1_20, %c0_21, %c0_22] : memref<3x64x128xbf16, #tpu.memory_space<vmem>>, vector<1x64x128xbf16>
    %18 = vector.shape_cast %17 : vector<1x64x128xbf16> to vector<64x128xbf16>
    %cst_23 = arith.constant dense<0.000000e+00> : vector<16x128xf32>
    %19 = tpu.matmul %16, %18, %cst_23 {dimension_numbers = #tpu.dot_dimension_numbers<[1], [0], [0], [1], [0, 0, 1, 1], [], []>} : vector<16x64xbf16>, vector<64x128xbf16>, vector<16x128xf32> -> vector<16x128xf32>
    %20 = arith.addf %15, %19 : vector<16x128xf32>
    %c2 = arith.constant 2 : index
    %c0_24 = arith.constant 0 : index
    %21 = vector.load %arg8[%c2, %c0_24] : memref<18x64xbf16, #tpu.memory_space<vmem>>, vector<16x64xbf16>
    %c2_25 = arith.constant 2 : index
    %c0_26 = arith.constant 0 : index
    %c0_27 = arith.constant 0 : index
    %22 = vector.load %arg2[%c2_25, %c0_26, %c0_27] : memref<3x64x128xbf16, #tpu.memory_space<vmem>>, vector<1x64x128xbf16>
    %23 = vector.shape_cast %22 : vector<1x64x128xbf16> to vector<64x128xbf16>
    %cst_28 = arith.constant dense<0.000000e+00> : vector<16x128xf32>
    %24 = tpu.matmul %21, %23, %cst_28 {dimension_numbers = #tpu.dot_dimension_numbers<[1], [0], [0], [1], [0, 0, 1, 1], [], []>} : vector<16x64xbf16>, vector<64x128xbf16>, vector<16x128xf32> -> vector<16x128xf32>
    %25 = arith.addf %20, %24 : vector<16x128xf32>
    %c0_29 = arith.constant 0 : index
    %c0_30 = arith.constant 0 : index
    %26 = vector.load %arg6[%c0_29, %c0_30] : memref<4x128xf32, #tpu.memory_space<vmem>>, vector<1x128xf32>
    %27 = vector.broadcast %26 : vector<1x128xf32> to vector<16x128xf32>
    %28 = arith.addf %25, %27 : vector<16x128xf32>
    %cst_31 = arith.constant 0.000000e+00 : f32
    %29 = vector.broadcast %cst_31 : f32 to vector<16x128xf32>
    %30 = arith.maximumf %28, %29 : vector<16x128xf32>
    %31 = arith.truncf %30 : vector<16x128xf32> to vector<16x128xbf16>
    %c1_32 = arith.constant 1 : index
    %c0_33 = arith.constant 0 : index
    %32 = vector.load %arg9[%c1_32, %c0_33] : memref<18x128xbf16, #tpu.memory_space<vmem>>, vector<16x128xbf16>
    tpu.vector_store %arg9[%c1_32, %c0_33], %31 {strides = array<i32>} : memref<18x128xbf16, #tpu.memory_space<vmem>>, vector<16x128xbf16>,
    %cst_34 = arith.constant 0.000000e+00 : f32
    %33 = vector.broadcast %cst_34 : f32 to vector<16x128xf32>
    %c0_35 = arith.constant 0 : index
    %c0_36 = arith.constant 0 : index
    %34 = vector.load %arg9[%c0_35, %c0_36] : memref<18x128xbf16, #tpu.memory_space<vmem>>, vector<16x128xbf16>
    %c0_37 = arith.constant 0 : index
    %c0_38 = arith.constant 0 : index
    %c0_39 = arith.constant 0 : index
    %35 = vector.load %arg3[%c0_37, %c0_38, %c0_39] : memref<3x128x128xbf16, #tpu.memory_space<vmem>>, vector<1x128x128xbf16>
    %36 = vector.shape_cast %35 : vector<1x128x128xbf16> to vector<128x128xbf16>
    %cst_40 = arith.constant dense<0.000000e+00> : vector<16x128xf32>
    %37 = tpu.matmul %34, %36, %cst_40 {dimension_numbers = #tpu.dot_dimension_numbers<[1], [0], [0], [1], [0, 0, 1, 1], [], []>} : vector<16x128xbf16>, vector<128x128xbf16>, vector<16x128xf32> -> vector<16x128xf32>
    %38 = arith.addf %33, %37 : vector<16x128xf32>
    %c1_41 = arith.constant 1 : index
    %c0_42 = arith.constant 0 : index
    %39 = vector.load %arg9[%c1_41, %c0_42] : memref<18x128xbf16, #tpu.memory_space<vmem>>, vector<16x128xbf16>
    %c1_43 = arith.constant 1 : index
    %c0_44 = arith.constant 0 : index
    %c0_45 = arith.constant 0 : index
    %40 = vector.load %arg3[%c1_43, %c0_44, %c0_45] : memref<3x128x128xbf16, #tpu.memory_space<vmem>>, vector<1x128x128xbf16>
    %41 = vector.shape_cast %40 : vector<1x128x128xbf16> to vector<128x128xbf16>
    %cst_46 = arith.constant dense<0.000000e+00> : vector<16x128xf32>
    %42 = tpu.matmul %39, %41, %cst_46 {dimension_numbers = #tpu.dot_dimension_numbers<[1], [0], [0], [1], [0, 0, 1, 1], [], []>} : vector<16x128xbf16>, vector<128x128xbf16>, vector<16x128xf32> -> vector<16x128xf32>
    %43 = arith.addf %38, %42 : vector<16x128xf32>
    %c2_47 = arith.constant 2 : index
    %c0_48 = arith.constant 0 : index
    %44 = vector.load %arg9[%c2_47, %c0_48] : memref<18x128xbf16, #tpu.memory_space<vmem>>, vector<16x128xbf16>
    %c2_49 = arith.constant 2 : index
    %c0_50 = arith.constant 0 : index
    %c0_51 = arith.constant 0 : index
    %45 = vector.load %arg3[%c2_49, %c0_50, %c0_51] : memref<3x128x128xbf16, #tpu.memory_space<vmem>>, vector<1x128x128xbf16>
    %46 = vector.shape_cast %45 : vector<1x128x128xbf16> to vector<128x128xbf16>
    %cst_52 = arith.constant dense<0.000000e+00> : vector<16x128xf32>
    %47 = tpu.matmul %44, %46, %cst_52 {dimension_numbers = #tpu.dot_dimension_numbers<[1], [0], [0], [1], [0, 0, 1, 1], [], []>} : vector<16x128xbf16>, vector<128x128xbf16>, vector<16x128xf32> -> vector<16x128xf32>
    %48 = arith.addf %43, %47 : vector<16x128xf32>
    %c1_53 = arith.constant 1 : index
    %c0_54 = arith.constant 0 : index
    %49 = vector.load %arg6[%c1_53, %c0_54] : memref<4x128xf32, #tpu.memory_space<vmem>>, vector<1x128xf32>
    %50 = vector.broadcast %49 : vector<1x128xf32> to vector<16x128xf32>
    %51 = arith.addf %48, %50 : vector<16x128xf32>
    %cst_55 = arith.constant 0.000000e+00 : f32
    %52 = vector.broadcast %cst_55 : f32 to vector<16x128xf32>
    %53 = arith.maximumf %51, %52 : vector<16x128xf32>
    %54 = arith.truncf %53 : vector<16x128xf32> to vector<16x128xbf16>
    %c1_56 = arith.constant 1 : index
    %c0_57 = arith.constant 0 : index
    %55 = vector.load %arg9[%c1_56, %c0_57] : memref<18x128xbf16, #tpu.memory_space<vmem>>, vector<16x128xbf16>
    tpu.vector_store %arg9[%c1_56, %c0_57], %54 {strides = array<i32>} : memref<18x128xbf16, #tpu.memory_space<vmem>>, vector<16x128xbf16>,
    %cst_58 = arith.constant 0.000000e+00 : f32
    %56 = vector.broadcast %cst_58 : f32 to vector<16x128xf32>
    %c0_59 = arith.constant 0 : index
    %c0_60 = arith.constant 0 : index
    %57 = vector.load %arg9[%c0_59, %c0_60] : memref<18x128xbf16, #tpu.memory_space<vmem>>, vector<16x128xbf16>
    %c0_61 = arith.constant 0 : index
    %c0_62 = arith.constant 0 : index
    %c0_63 = arith.constant 0 : index
    %58 = vector.load %arg4[%c0_61, %c0_62, %c0_63] : memref<3x128x128xbf16, #tpu.memory_space<vmem>>, vector<1x128x128xbf16>
    %59 = vector.shape_cast %58 : vector<1x128x128xbf16> to vector<128x128xbf16>
    %cst_64 = arith.constant dense<0.000000e+00> : vector<16x128xf32>
    %60 = tpu.matmul %57, %59, %cst_64 {dimension_numbers = #tpu.dot_dimension_numbers<[1], [0], [0], [1], [0, 0, 1, 1], [], []>} : vector<16x128xbf16>, vector<128x128xbf16>, vector<16x128xf32> -> vector<16x128xf32>
    %61 = arith.addf %56, %60 : vector<16x128xf32>
    %c1_65 = arith.constant 1 : index
    %c0_66 = arith.constant 0 : index
    %62 = vector.load %arg9[%c1_65, %c0_66] : memref<18x128xbf16, #tpu.memory_space<vmem>>, vector<16x128xbf16>
    %c1_67 = arith.constant 1 : index
    %c0_68 = arith.constant 0 : index
    %c0_69 = arith.constant 0 : index
    %63 = vector.load %arg4[%c1_67, %c0_68, %c0_69] : memref<3x128x128xbf16, #tpu.memory_space<vmem>>, vector<1x128x128xbf16>
    %64 = vector.shape_cast %63 : vector<1x128x128xbf16> to vector<128x128xbf16>
    %cst_70 = arith.constant dense<0.000000e+00> : vector<16x128xf32>
    %65 = tpu.matmul %62, %64, %cst_70 {dimension_numbers = #tpu.dot_dimension_numbers<[1], [0], [0], [1], [0, 0, 1, 1], [], []>} : vector<16x128xbf16>, vector<128x128xbf16>, vector<16x128xf32> -> vector<16x128xf32>
    %66 = arith.addf %61, %65 : vector<16x128xf32>
    %c2_71 = arith.constant 2 : index
    %c0_72 = arith.constant 0 : index
    %67 = vector.load %arg9[%c2_71, %c0_72] : memref<18x128xbf16, #tpu.memory_space<vmem>>, vector<16x128xbf16>
    %c2_73 = arith.constant 2 : index
    %c0_74 = arith.constant 0 : index
    %c0_75 = arith.constant 0 : index
    %68 = vector.load %arg4[%c2_73, %c0_74, %c0_75] : memref<3x128x128xbf16, #tpu.memory_space<vmem>>, vector<1x128x128xbf16>
    %69 = vector.shape_cast %68 : vector<1x128x128xbf16> to vector<128x128xbf16>
    %cst_76 = arith.constant dense<0.000000e+00> : vector<16x128xf32>
    %70 = tpu.matmul %67, %69, %cst_76 {dimension_numbers = #tpu.dot_dimension_numbers<[1], [0], [0], [1], [0, 0, 1, 1], [], []>} : vector<16x128xbf16>, vector<128x128xbf16>, vector<16x128xf32> -> vector<16x128xf32>
    %71 = arith.addf %66, %70 : vector<16x128xf32>
    %c2_77 = arith.constant 2 : index
    %c0_78 = arith.constant 0 : index
    %72 = vector.load %arg6[%c2_77, %c0_78] : memref<4x128xf32, #tpu.memory_space<vmem>>, vector<1x128xf32>
    %73 = vector.broadcast %72 : vector<1x128xf32> to vector<16x128xf32>
    %74 = arith.addf %71, %73 : vector<16x128xf32>
    %cst_79 = arith.constant 0.000000e+00 : f32
    %75 = vector.broadcast %cst_79 : f32 to vector<16x128xf32>
    %76 = arith.maximumf %74, %75 : vector<16x128xf32>
    %77 = arith.truncf %76 : vector<16x128xf32> to vector<16x128xbf16>
    %c1_80 = arith.constant 1 : index
    %c0_81 = arith.constant 0 : index
    %78 = vector.load %arg9[%c1_80, %c0_81] : memref<18x128xbf16, #tpu.memory_space<vmem>>, vector<16x128xbf16>
    tpu.vector_store %arg9[%c1_80, %c0_81], %77 {strides = array<i32>} : memref<18x128xbf16, #tpu.memory_space<vmem>>, vector<16x128xbf16>,
    %cst_82 = arith.constant 0.000000e+00 : f32
    %79 = vector.broadcast %cst_82 : f32 to vector<16x128xf32>
    %c0_83 = arith.constant 0 : index
    %c0_84 = arith.constant 0 : index
    %80 = vector.load %arg9[%c0_83, %c0_84] : memref<18x128xbf16, #tpu.memory_space<vmem>>, vector<16x128xbf16>
    %c0_85 = arith.constant 0 : index
    %c0_86 = arith.constant 0 : index
    %c0_87 = arith.constant 0 : index
    %81 = vector.load %arg5[%c0_85, %c0_86, %c0_87] : memref<3x128x128xbf16, #tpu.memory_space<vmem>>, vector<1x128x128xbf16>
    %82 = vector.shape_cast %81 : vector<1x128x128xbf16> to vector<128x128xbf16>
    %cst_88 = arith.constant dense<0.000000e+00> : vector<16x128xf32>
    %83 = tpu.matmul %80, %82, %cst_88 {dimension_numbers = #tpu.dot_dimension_numbers<[1], [0], [0], [1], [0, 0, 1, 1], [], []>} : vector<16x128xbf16>, vector<128x128xbf16>, vector<16x128xf32> -> vector<16x128xf32>
    %84 = arith.addf %79, %83 : vector<16x128xf32>
    %c1_89 = arith.constant 1 : index
    %c0_90 = arith.constant 0 : index
    %85 = vector.load %arg9[%c1_89, %c0_90] : memref<18x128xbf16, #tpu.memory_space<vmem>>, vector<16x128xbf16>
    %c1_91 = arith.constant 1 : index
    %c0_92 = arith.constant 0 : index
    %c0_93 = arith.constant 0 : index
    %86 = vector.load %arg5[%c1_91, %c0_92, %c0_93] : memref<3x128x128xbf16, #tpu.memory_space<vmem>>, vector<1x128x128xbf16>
    %87 = vector.shape_cast %86 : vector<1x128x128xbf16> to vector<128x128xbf16>
    %cst_94 = arith.constant dense<0.000000e+00> : vector<16x128xf32>
    %88 = tpu.matmul %85, %87, %cst_94 {dimension_numbers = #tpu.dot_dimension_numbers<[1], [0], [0], [1], [0, 0, 1, 1], [], []>} : vector<16x128xbf16>, vector<128x128xbf16>, vector<16x128xf32> -> vector<16x128xf32>
    %89 = arith.addf %84, %88 : vector<16x128xf32>
    %c2_95 = arith.constant 2 : index
    %c0_96 = arith.constant 0 : index
    %90 = vector.load %arg9[%c2_95, %c0_96] : memref<18x128xbf16, #tpu.memory_space<vmem>>, vector<16x128xbf16>
    %c2_97 = arith.constant 2 : index
    %c0_98 = arith.constant 0 : index
    %c0_99 = arith.constant 0 : index
    %91 = vector.load %arg5[%c2_97, %c0_98, %c0_99] : memref<3x128x128xbf16, #tpu.memory_space<vmem>>, vector<1x128x128xbf16>
    %92 = vector.shape_cast %91 : vector<1x128x128xbf16> to vector<128x128xbf16>
    %cst_100 = arith.constant dense<0.000000e+00> : vector<16x128xf32>
    %93 = tpu.matmul %90, %92, %cst_100 {dimension_numbers = #tpu.dot_dimension_numbers<[1], [0], [0], [1], [0, 0, 1, 1], [], []>} : vector<16x128xbf16>, vector<128x128xbf16>, vector<16x128xf32> -> vector<16x128xf32>
    %94 = arith.addf %89, %93 : vector<16x128xf32>
    %c3 = arith.constant 3 : index
    %c0_101 = arith.constant 0 : index
    %95 = vector.load %arg6[%c3, %c0_101] : memref<4x128xf32, #tpu.memory_space<vmem>>, vector<1x128xf32>
    %96 = vector.broadcast %95 : vector<1x128xf32> to vector<16x128xf32>
    %97 = arith.addf %94, %96 : vector<16x128xf32>
    %cst_102 = arith.constant 0.000000e+00 : f32
    %98 = vector.broadcast %cst_102 : f32 to vector<16x128xf32>
    %99 = arith.maximumf %97, %98 : vector<16x128xf32>
    %c0_103 = arith.constant 0 : index
    %c0_104 = arith.constant 0 : index
    %c0_105 = arith.constant 0 : index
    %100 = vector.load %arg7[%c0_103, %c0_104, %c0_105] : memref<1x16x128xf32, #tpu.memory_space<vmem>>, vector<1x16x128xf32>
    %101 = vector.shape_cast %100 : vector<1x16x128xf32> to vector<16x128xf32>
    %102 = vector.shape_cast %99 : vector<16x128xf32> to vector<1x16x128xf32>
    tpu.vector_store %arg7[%c0_103, %c0_104, %c0_105], %102 {strides = array<i32>} : memref<1x16x128xf32, #tpu.memory_space<vmem>>, vector<1x16x128xf32>,
    return
  }
  func.func @transform_0(%arg0: i32) -> (i32, i32, i32) {
    %c0_i32 = arith.constant 0 : i32
    %c0_i32_0 = arith.constant 0 : i32
    %c0_i32_1 = arith.constant 0 : i32
    return %arg0, %c0_i32, %c0_i32_0 : i32, i32, i32
  }
  func.func @transform_1(%arg0: i32) -> (i32, i32, i32) {
    %c0_i32 = arith.constant 0 : i32
    %c0_i32_0 = arith.constant 0 : i32
    %c0_i32_1 = arith.constant 0 : i32
    %c0_i32_2 = arith.constant 0 : i32
    return %c0_i32, %c0_i32_0, %c0_i32_1 : i32, i32, i32
  }
  func.func @transform_2(%arg0: i32) -> (i32, i32, i32) {
    %c0_i32 = arith.constant 0 : i32
    %c0_i32_0 = arith.constant 0 : i32
    %c0_i32_1 = arith.constant 0 : i32
    %c0_i32_2 = arith.constant 0 : i32
    return %c0_i32, %c0_i32_0, %c0_i32_1 : i32, i32, i32
  }
  func.func @transform_3(%arg0: i32) -> (i32, i32, i32) {
    %c0_i32 = arith.constant 0 : i32
    %c0_i32_0 = arith.constant 0 : i32
    %c0_i32_1 = arith.constant 0 : i32
    %c0_i32_2 = arith.constant 0 : i32
    return %c0_i32, %c0_i32_0, %c0_i32_1 : i32, i32, i32
  }
  func.func @transform_4(%arg0: i32) -> (i32, i32, i32) {
    %c0_i32 = arith.constant 0 : i32
    %c0_i32_0 = arith.constant 0 : i32
    %c0_i32_1 = arith.constant 0 : i32
    %c0_i32_2 = arith.constant 0 : i32
    return %c0_i32, %c0_i32_0, %c0_i32_1 : i32, i32, i32
  }
  func.func @transform_5(%arg0: i32) -> (i32, i32) {
    %c0_i32 = arith.constant 0 : i32
    %c0_i32_0 = arith.constant 0 : i32
    %c0_i32_1 = arith.constant 0 : i32
    return %c0_i32, %c0_i32_0 : i32, i32
  }
  func.func @transform_6(%arg0: i32) -> (i32, i32, i32) {
    %c0_i32 = arith.constant 0 : i32
    %c0_i32_0 = arith.constant 0 : i32
    %c0_i32_1 = arith.constant 0 : i32
    return %arg0, %c0_i32, %c0_i32_0 : i32, i32, i32
  }
}

</mosaic_0001>

<llo_original>
// kernel: tpu_custom_call.1
$region0: #{tpu_custom_call.1}
  #allocation0 [shape = 'u32[]', space=smem, size = 0x4, offset = 0x4, fixed_abs, tag = 'smem constant byte address 0x4 - core index']
  #allocation1 [shape = 'u32[144,128]{1,0:T(1,128)}', space=vmem, size = 0x12000, scoped, tag = 'internal scratch']
  #allocation2 [shape = 'bf16[18,64]{1,0:T(8,128)(2,1)}', space=vmem, size = 0x1800, scoped, tag = 'scratch operand']
  #allocation3 [shape = 'bf16[18,128]{1,0:T(8,128)(2,1)}', space=vmem, size = 0x1800, scoped, tag = 'scratch operand']
  %s0 = inlined_call_operand.hbm [shape: f32[2,16,64], index: 0, kind: input, shape index: {}]
  %s1 = inlined_call_operand.hbm [shape: bf16[3,64,128], index: 1, kind: input, shape index: {}]
  %s2 = inlined_call_operand.hbm [shape: bf16[3,128,128], index: 2, kind: input, shape index: {}]
  %s3 = inlined_call_operand.hbm [shape: bf16[3,128,128], index: 3, kind: input, shape index: {}]
  %s4 = inlined_call_operand.hbm [shape: bf16[3,128,128], index: 4, kind: input, shape index: {}]
  %s5 = inlined_call_operand.vmem [shape: f32[4,128], index: 5, kind: input, shape index: {}]
  %s6 = inlined_call_operand.hbm [shape: f32[2,16,128], index: 6, kind: output, shape index: {}]
  %s7 = sld [smem:[#allocation0]]
  $region77: #{tpu_custom_call.1} parent=0
    _
  %s9 = ssub.s32 1, %s7
  %s10 = scalar_select 0, %s9, %s7
  $region1: #{tpu_custom_call.1} parent=0
    #allocation4 [shape = 'u8[16384]{0}', space=vmem, size = 0x4000, scoped, tag = 'input window, operand 0']
    #allocation5 [shape = 's32[2]{0}', space=sflag, size = 0x8, scoped, tag = 'scoped memory for tpu_custom_call.1']
    #allocation6 [shape = 's32[2]{0}', space=sflag, size = 0x8, scoped, tag = 'scoped memory for tpu_custom_call.1']
    #allocation7 [shape = 'u8[49152]{0}', space=vmem, size = 0xc000, scoped, tag = 'input window, operand 1, single buffered']
    #allocation8 [shape = 's32[1]{0}', space=sflag, size = 0x4, scoped, tag = 'scoped memory for tpu_custom_call.1']
    #allocation9 [shape = 'u8[98304]{0}', space=vmem, size = 0x18000, scoped, tag = 'input window, operand 2, single buffered']
    #allocation10 [shape = 'u8[98304]{0}', space=vmem, size = 0x18000, scoped, tag = 'input window, operand 3, single buffered']
    #allocation11 [shape = 's32[1]{0}', space=sflag, size = 0x4, scoped, tag = 'scoped memory for tpu_custom_call.1']
    #allocation12 [shape = 'u8[98304]{0}', space=vmem, size = 0x18000, scoped, tag = 'input window, operand 4, single buffered']
    #allocation13 [shape = 'u8[16384]{0}', space=vmem, size = 0x4000, scoped, tag = 'output window, operand 0']
    %11 = vsyncpa [#allocation5], 0
    %s12 = scalar_lea.sflag [#allocation5], 1
    %13 = vsyncpa %s12, 0
    %14 = vsyncpa [#allocation8], 0
    %15 = vsyncpa [#allocation11], 0
    %16 = vsyncpa [#allocation6], 0
    %s17 = scalar_lea.sflag [#allocation6], 1
    %18 = vsyncpa %s17, 0
    loop: start=0, step=1, limit=4
    $region2: #{tpu_custom_call.1} parent=1 // loop_pre_header
      _
    $region3: #{tpu_custom_call.1} parent=1 // loop_header
      %s20 = sphi 0, %s24
      %p21 = scmp.ge.s32.totalorder %s20, 4
      %s30 = sphi 0, %s32
      %s33 = sphi 0, %s30
      %s34 = sphi 0, %s33
      %s50 = sphi 0, %s34
      %s54 = sphi 0, %s54
      %s56 = sphi 0, %s54
      %s57 = sphi 0, %s56
      %s71 = sphi 0, %s57
      %s75 = sphi 0, %s75
      %s77 = sphi 0, %s75
      %s78 = sphi 0, %s77
      %s92 = sphi 0, %s78
      %s96 = sphi 0, %s96
      %s98 = sphi 0, %s96
      %s99 = sphi 0, %s98
      %s113 = sphi 0, %s99
      %s117 = sphi 0, %s117
      %s119 = sphi 0, %s117
      %s120 = sphi 0, %s119
      %s134 = sphi 0, %s120
      %s138 = sphi 0, %s138
      %s140 = sphi 0, %s138
      %s141 = sphi 0, %s140
      %s155 = sphi 0, %s141
      %s161 = sphi 0, %s163
      %s164 = sphi 0, %s161
      %s165 = sphi 0, %s164
      %s181 = sphi 0, %s165
    $region4: #{tpu_custom_call.1} parent=1 // loop_header_branch
      %23 = sbr.rel (%p21) target = $region8
    $region5: #{tpu_custom_call.1} parent=1 // loop_body
      %s25 = ssub.s32 %s20, 1
      %s26 = ssub.s32 %s20, 2
      %s27 = sadd.s32 %s20, 1
      %s28 = ssub.s32 %s20, %s27
      %p29 = scmp.eq.s32.totalorder %s28, 0
      %s31 = sadd.s32 %s30, 1
      %s32 = scalar_select %p29, %s30, %s31
      %p35 = pneg %p29
      %p36 = scmp.eq.s32.totalorder %s20, 1
      %p37 = por %p35, %p36
      %p38 = scmp.ne.s32.totalorder %s30, %s33
      %p39 = scmp.eq.s32.totalorder %s20, 0
      %p40 = por %p38, %p39
      %p41 = scmp.ne.s32.totalorder %s30, %s33
      %p42 = scmp.eq.s32.totalorder %s25, 1
      %p43 = por %p41, %p42
      %p44 = scmp.ne.s32.totalorder %s33, %s34
      %p45 = scmp.eq.s32.totalorder %s25, 0
      %p46 = por %p44, %p45
      %p47 = scmp.ne.s32.totalorder %s33, %s34
      %p48 = scmp.eq.s32.totalorder %s26, 1
      %p49 = por %p47, %p48
      %p51 = scmp.ne.s32.totalorder %s34, %s50
      %p52 = scmp.eq.s32.totalorder %s26, 0
      %p53 = por %p51, %p52
      %s55 = sadd.s32 %s54, 1
      %p58 = scmp.eq.s32.totalorder %s20, 1
      %p59 = scmp.ne.s32.totalorder %s54, %s56
      %p60 = scmp.eq.s32.totalorder %s20, 0
      %p61 = por %p59, %p60
      %p62 = scmp.ne.s32.totalorder %s54, %s56
      %p63 = scmp.eq.s32.totalorder %s25, 1
      %p64 = por %p62, %p63
      %p65 = scmp.ne.s32.totalorder %s56, %s57
      %p66 = scmp.eq.s32.totalorder %s25, 0
      %p67 = por %p65, %p66
      %p68 = scmp.ne.s32.totalorder %s56, %s57
      %p69 = scmp.eq.s32.totalorder %s26, 1
      %p70 = por %p68, %p69
      %p72 = scmp.ne.s32.totalorder %s57, %s71
      %p73 = scmp.eq.s32.totalorder %s26, 0
      %p74 = por %p72, %p73
      %s76 = sadd.s32 %s75, 1
      %p79 = scmp.eq.s32.totalorder %s20, 1
      %p80 = scmp.ne.s32.totalorder %s75, %s77
      %p81 = scmp.eq.s32.totalorder %s20, 0
      %p82 = por %p80, %p81
      %p83 = scmp.ne.s32.totalorder %s75, %s77
      %p84 = scmp.eq.s32.totalorder %s25, 1
      %p85 = por %p83, %p84
      %p86 = scmp.ne.s32.totalorder %s77, %s78
      %p87 = scmp.eq.s32.totalorder %s25, 0
      %p88 = por %p86, %p87
      %p89 = scmp.ne.s32.totalorder %s77, %s78
      %p90 = scmp.eq.s32.totalorder %s26, 1
      %p91 = por %p89, %p90
      %p93 = scmp.ne.s32.totalorder %s78, %s92
      %p94 = scmp.eq.s32.totalorder %s26, 0
      %p95 = por %p93, %p94
      %s97 = sadd.s32 %s96, 1
      %p100 = scmp.eq.s32.totalorder %s20, 1
      %p101 = scmp.ne.s32.totalorder %s96, %s98
      %p102 = scmp.eq.s32.totalorder %s20, 0
      %p103 = por %p101, %p102
      %p104 = scmp.ne.s32.totalorder %s96, %s98
      %p105 = scmp.eq.s32.totalorder %s25, 1
      %p106 = por %p104, %p105
      %p107 = scmp.ne.s32.totalorder %s98, %s99
      %p108 = scmp.eq.s32.totalorder %s25, 0
      %p109 = por %p107, %p108
      %p110 = scmp.ne.s32.totalorder %s98, %s99
      %p111 = scmp.eq.s32.totalorder %s26, 1
      %p112 = por %p110, %p111
      %p114 = scmp.ne.s32.totalorder %s99, %s113
      %p115 = scmp.eq.s32.totalorder %s26, 0
      %p116 = por %p114, %p115
      %s118 = sadd.s32 %s117, 1
      %p121 = scmp.eq.s32.totalorder %s20, 1
      %p122 = scmp.ne.s32.totalorder %s117, %s119
      %p123 = scmp.eq.s32.totalorder %s20, 0
      %p124 = por %p122, %p123
      %p125 = scmp.ne.s32.totalorder %s117, %s119
      %p126 = scmp.eq.s32.totalorder %s25, 1
      %p127 = por %p125, %p126
      %p128 = scmp.ne.s32.totalorder %s119, %s120
      %p129 = scmp.eq.s32.totalorder %s25, 0
      %p130 = por %p128, %p129
      %p131 = scmp.ne.s32.totalorder %s119, %s120
      %p132 = scmp.eq.s32.totalorder %s26, 1
      %p133 = por %p131, %p132
      %p135 = scmp.ne.s32.totalorder %s120, %s134
      %p136 = scmp.eq.s32.totalorder %s26, 0
      %p137 = por %p135, %p136
      %s139 = sadd.s32 %s138, 1
      %p142 = scmp.eq.s32.totalorder %s20, 1
      %p143 = scmp.ne.s32.totalorder %s138, %s140
      %p144 = scmp.eq.s32.totalorder %s20, 0
      %p145 = por %p143, %p144
      %p146 = scmp.ne.s32.totalorder %s138, %s140
      %p147 = scmp.eq.s32.totalorder %s25, 1
      %p148 = por %p146, %p147
      %p149 = scmp.ne.s32.totalorder %s140, %s141
      %p150 = scmp.eq.s32.totalorder %s25, 0
      %p151 = por %p149, %p150
      %p152 = scmp.ne.s32.totalorder %s140, %s141
      %p153 = scmp.eq.s32.totalorder %s26, 1
      %p154 = por %p152, %p153
      %p156 = scmp.ne.s32.totalorder %s141, %s155
      %p157 = scmp.eq.s32.totalorder %s26, 0
      %p158 = por %p156, %p157
      %s159 = ssub.s32 %s20, %s27
      %p160 = scmp.eq.s32.totalorder %s159, 0
      %s162 = sadd.s32 %s161, 1
      %s163 = scalar_select %p160, %s161, %s162
      %p166 = pneg %p160
      %p167 = scmp.eq.s32.totalorder %s20, 1
      %p168 = por %p166, %p167
      %p169 = scmp.ne.s32.totalorder %s161, %s164
      %p170 = scmp.eq.s32.totalorder %s20, 0
      %p171 = por %p169, %p170
      %p172 = scmp.ne.s32.totalorder %s161, %s164
      %p173 = scmp.eq.s32.totalorder %s25, 1
      %p174 = por %p172, %p173
      %p175 = scmp.ne.s32.totalorder %s164, %s165
      %p176 = scmp.eq.s32.totalorder %s25, 0
      %p177 = por %p175, %p176
      %p178 = scmp.ne.s32.totalorder %s164, %s165
      %p179 = scmp.eq.s32.totalorder %s26, 1
      %p180 = por %p178, %p179
      %p182 = scmp.ne.s32.totalorder %s165, %s181
      %p183 = scmp.eq.s32.totalorder %s26, 0
      %p184 = por %p182, %p183
      %p185 = scmp.le.s32.totalorder 1, %s20
      %p186 = scmp.lt.s32.totalorder %s20, 3
      %p187 = pnand %p185, %p186
      %p188 = pneg %p187
      // Predicated region
      $region9: #{tpu_custom_call.1} parent=5 // pred_check
        _
      $region10: #{tpu_custom_call.1} parent=5 // pred_check_branch
        %190 = sbr.rel (%p187) target = $region12
      $region11: #{tpu_custom_call.1} parent=5 // pred_region
        %s191 = ssub.s32 %s20, 1
        // Predicated region
        $region13: #{tpu_custom_call.1} parent=11 // pred_check
          %p192 = pneg %p67
        $region14: #{tpu_custom_call.1} parent=11 // pred_check_branch
          %194 = sbr.rel (%p192) target = $region16
        $region15: #{tpu_custom_call.1} parent=11 // pred_region
          %s196 = ssub.s32 1536, 1536
          %197 = vsyncadd [#allocation8], %s196
          %s198 = sshll.u32 [#allocation7], 4
          %s199 = int_to_ptr.vmem [resolvable:$true] %s198
          %204 = dma.hbm_to_vmem [thread:$0]  %s1, 1536, %s199, [#allocation8], 64, 64, 4
        $region16: #{tpu_custom_call.1} parent=11 // pred_fallthru
          _
        // Predicated region
        $region17: #{tpu_custom_call.1} parent=11 // pred_check
          %p205 = pneg %p88
        $region18: #{tpu_custom_call.1} parent=11 // pred_check_branch
          %207 = sbr.rel (%p205) target = $region20
        $region19: #{tpu_custom_call.1} parent=11 // pred_region
          %s209 = ssub.s32 3072, 3072
          %210 = vsyncadd [#allocation8], %s209
          %s211 = sshll.u32 [#allocation9], 4
          %s212 = int_to_ptr.vmem [resolvable:$true] %s211
          %217 = dma.hbm_to_vmem [thread:$0]  %s2, 3072, %s212, [#allocation8], 64, 64, 4
        $region20: #{tpu_custom_call.1} parent=11 // pred_fallthru
          _
        // Predicated region
        $region21: #{tpu_custom_call.1} parent=11 // pred_check
          %p218 = pneg %p109
        $region22: #{tpu_custom_call.1} parent=11 // pred_check_branch
          %220 = sbr.rel (%p218) target = $region24
        $region23: #{tpu_custom_call.1} parent=11 // pred_region
          %s222 = ssub.s32 3072, 3072
          %223 = vsyncadd [#allocation11], %s222
          %s224 = sshll.u32 [#allocation10], 4
          %s225 = int_to_ptr.vmem [resolvable:$true] %s224
          %230 = dma.hbm_to_vmem [thread:$0]  %s3, 3072, %s225, [#allocation11], 64, 64, 4
        $region24: #{tpu_custom_call.1} parent=11 // pred_fallthru
          _
        // Predicated region
        $region25: #{tpu_custom_call.1} parent=11 // pred_check
          %p231 = pneg %p130
        $region26: #{tpu_custom_call.1} parent=11 // pred_check_branch
          %233 = sbr.rel (%p231) target = $region28
        $region27: #{tpu_custom_call.1} parent=11 // pred_region
          %s235 = ssub.s32 3072, 3072
          %236 = vsyncadd [#allocation11], %s235
          %s237 = sshll.u32 [#allocation12], 4
          %s238 = int_to_ptr.vmem [resolvable:$true] %s237
          %243 = dma.hbm_to_vmem [thread:$0]  %s4, 3072, %s238, [#allocation11], 64, 64, 4
        $region28: #{tpu_custom_call.1} parent=11 // pred_fallthru
          _
        // Predicated region
        $region29: #{tpu_custom_call.1} parent=11 // pred_check
          %p244 = pneg %p151
        $region30: #{tpu_custom_call.1} parent=11 // pred_check_branch
          %246 = sbr.rel (%p244) target = $region32
        $region31: #{tpu_custom_call.1} parent=11 // pred_region
          _
        $region32: #{tpu_custom_call.1} parent=11 // pred_fallthru
          _
      $region12: #{tpu_custom_call.1} parent=5 // pred_fallthru
        _
      %p247 = scmp.lt.s32.totalorder %s20, 2
      // Predicated region
      $region33: #{tpu_custom_call.1} parent=5 // pred_check
        %p248 = pneg %p247
      $region34: #{tpu_custom_call.1} parent=5 // pred_check_branch
        %250 = sbr.rel (%p248) target = $region36
      $region35: #{tpu_custom_call.1} parent=5 // pred_region
        // Predicated region
        $region37: #{tpu_custom_call.1} parent=35 // pred_check
          %p251 = pneg %p40
        $region38: #{tpu_custom_call.1} parent=35 // pred_check_branch
          %253 = sbr.rel (%p251) target = $region40
        $region39: #{tpu_custom_call.1} parent=35 // pred_region
          %s254 = sand.u32 %s30, 1
          %s255 = scalar_lea.sflag [#allocation5], %s254
          %s256 = sand.u32 %s30, 1
          %s257 = smul.addr %s256, 16
          %s258 = scalar_lea.vmem [#allocation4], %s257
          %s260 = ssub.s32 256, 256
          %261 = vsyncadd %s255, %s260
          %s262 = smul.addr %s20, 2
          %s263 = smul.addr %s262, 128
          %s264 = scalar_lea.hbm %s0, %s263
          %s265 = sshll.u32 %s258, 4
          %s266 = int_to_ptr.vmem [resolvable:$true] %s265
          %271 = dma.hbm_to_vmem [thread:$0]  %s264, 256, %s266, %s255, 128, 128, 8
        $region40: #{tpu_custom_call.1} parent=35 // pred_fallthru
          _
      $region36: #{tpu_custom_call.1} parent=5 // pred_fallthru
        _
      %p272 = scmp.le.s32.totalorder 1, %s20
      %p273 = scmp.lt.s32.totalorder %s20, 3
      %p274 = pnand %p272, %p273
      %p275 = pneg %p274
      // Predicated region
      $region41: #{tpu_custom_call.1} parent=5 // pred_check
        _
      $region42: #{tpu_custom_call.1} parent=5 // pred_check_branch
        %277 = sbr.rel (%p274) target = $region44
      $region43: #{tpu_custom_call.1} parent=5 // pred_region
        %s278 = ssub.s32 %s20, 1
        %s279 = sand.u32 %s33, 1
        %s280 = scalar_lea.sflag [#allocation5], %s279
        %s281 = sand.u32 %s33, 1
        %s282 = smul.addr %s281, 16
        %s283 = scalar_lea.vmem [#allocation4], %s282
        // Predicated region
        $region45: #{tpu_custom_call.1} parent=43 // pred_check
          %p284 = pneg %p46
        $region46: #{tpu_custom_call.1} parent=43 // pred_check_branch
          %286 = sbr.rel (%p284) target = $region48
        $region47: #{tpu_custom_call.1} parent=43 // pred_region
          %287 = dma.done %s280, 256
        $region48: #{tpu_custom_call.1} parent=43 // pred_fallthru
          _
        // Predicated region
        $region49: #{tpu_custom_call.1} parent=43 // pred_check
          %p288 = pneg %p67
        $region50: #{tpu_custom_call.1} parent=43 // pred_check_branch
          %290 = sbr.rel (%p288) target = $region52
        $region51: #{tpu_custom_call.1} parent=43 // pred_region
          %291 = dma.done [#allocation8], 1536
        $region52: #{tpu_custom_call.1} parent=43 // pred_fallthru
          _
        // Predicated region
        $region53: #{tpu_custom_call.1} parent=43 // pred_check
          %p292 = pneg %p88
        $region54: #{tpu_custom_call.1} parent=43 // pred_check_branch
          %294 = sbr.rel (%p292) target = $region56
        $region55: #{tpu_custom_call.1} parent=43 // pred_region
          %295 = dma.done [#allocation8], 3072
        $region56: #{tpu_custom_call.1} parent=43 // pred_fallthru
          _
        // Predicated region
        $region57: #{tpu_custom_call.1} parent=43 // pred_check
          %p296 = pneg %p109
        $region58: #{tpu_custom_call.1} parent=43 // pred_check_branch
          %298 = sbr.rel (%p296) target = $region60
        $region59: #{tpu_custom_call.1} parent=43 // pred_region
          %299 = dma.done [#allocation11], 3072
        $region60: #{tpu_custom_call.1} parent=43 // pred_fallthru
          _
        // Predicated region
        $region61: #{tpu_custom_call.1} parent=43 // pred_check
          %p300 = pneg %p130
        $region62: #{tpu_custom_call.1} parent=43 // pred_check_branch
          %302 = sbr.rel (%p300) target = $region64
        $region63: #{tpu_custom_call.1} parent=43 // pred_region
          %303 = dma.done [#allocation11], 3072
        $region64: #{tpu_custom_call.1} parent=43 // pred_fallthru
          _
        %s304 = sand.u32 %s33, 1
        %s305 = scalar_lea.sflag [#allocation5], %s304
        %s306 = sand.u32 %s33, 1
        %s307 = smul.addr %s306, 16
        %s308 = scalar_lea.vmem [#allocation4], %s307
        %p309 = pneg %p46
        %p310 = pneg %p43
        %p311 = pneg %p67
        %p312 = pneg %p64
        %p313 = pneg %p88
        %p314 = pneg %p85
        %p315 = pneg %p109
        %p316 = pneg %p106
        %p317 = pneg %p130
        %p318 = pneg %p127
        %p319 = pneg %p151
        %p320 = pneg %p148
        %p321 = pneg %p177
        %p322 = pneg %p174
        %s323 = sand.u32 %s164, 1
        %s324 = scalar_lea.sflag [#allocation6], %s323
        %s325 = sand.u32 %s164, 1
        %s326 = smul.addr %s325, 16
        %s327 = scalar_lea.vmem [#allocation13], %s326
        %vm329 = vcmask 516096
        %vm330 = vsmask.f32 256
        %vm331 = vmand %vm329, %vm330
        %v332 = vld [vmem:[#allocation2] sm:$0x1]
        %v333 = vsel %vm331, 0, %v332
        %334 = vst [vmem:[#allocation2] sm:$0x1] %v333
        %vm335 = vcmask 1040384
        %vm336 = vmand %vm335, %vm330
        %v337 = vld [vmem:[#allocation3] sm:$0x1]
        %v338 = vsel %vm336, 0, %v337
        %339 = vst [vmem:[#allocation3] sm:$0x1] %v338
        %vm340 = vsmask.f32 7938
        %vm341 = vmand %vm329, %vm340
        %v342 = vld [vmem:[#allocation2 + $0x8] sm:$0x1]
        %v343 = vsel %vm341, 0, %v342
        %344 = vst [vmem:[#allocation2 + $0x8] sm:$0x1] %v343
        %vm345 = vmand %vm335, %vm340
        %v346 = vld [vmem:[#allocation3 + $0x8] sm:$0x1]
        %v347 = vsel %vm345, 0, %v346
        %348 = vst [vmem:[#allocation3 + $0x8] sm:$0x1] %v347
        %v349 = vld [vmem:[%s283] sm:$0xff]
        %v350 = vld [vmem:[%s283 + $0x8] sm:$0xff]
        %v351 = vpack.c.bf16 %v350, %v349
        %v353 = vunpack.c.l.b16 %v351
        %v354 = vunpack.c.h.b16 %v351
        %v355 = vpack.c.b16 %v353, %v353
        %v356 = vpack.c.b16 %v354, %v354
        %vm357 = vsmask.f32 4368
        %vm358 = vmor %vm330, %vm357
        %v360 = vshrl.u32 %v355, 16
        %v362 = vrot.slane %v360, 7
        %v363 = vshll.u32 %v355, 16
        %v365 = vor.u32 %v362, %v363
        %v366 = vrot.slane %v362, 4
        %v368 = vshrl.u32 %v356, 16
        %v370 = vrot.slane %v368, 7
        %v371 = vshll.u32 %v356, 16
        %v373 = vor.u32 %v370, %v371
        %v374 = vsel %vm358, %v366, %v373
        %v375 = vrot.slane %v370, 4
        %vm379 = vcmask 519168
        %vm380 = vmand %vm379, %vm340
        %v381 = vld [vmem:[#allocation2] sm:$0xf]
        %v382 = vsel %vm380, %v365, %v381
        %383 = vst [vmem:[#allocation2] sm:$0xf] %v382
        %vm384 = vcmask 519168
        %385 = vst.msk [vmem:[#allocation2 + $0x4] sm:$0xf] %vm384, %v374
        %v386 = vld [vmem:[#allocation2 + $0x8] sm:$0x1]
        %v387 = vsel %vm331, %v375, %v386
        %388 = vst [vmem:[#allocation2 + $0x8] sm:$0x1] %v387
        %v389 = vld [vmem:[#allocation2] sm:$0xf]
        %v390 = vld [vmem:[#allocation2 + $0x4] sm:$0xf]
        %v391 = vld [vmem:[#allocation7] sm:$0xf]
        %v392 = vld [vmem:[#allocation7 + $0x4] sm:$0xf]
        %v393 = vld [vmem:[#allocation7 + $0x8] sm:$0xf]
        %v394 = vld [vmem:[#allocation7 + $0xc] sm:$0xf]
        %v395 = vld [vmem:[#allocation7 + $0x10] sm:$0xf]
        %v396 = vld [vmem:[#allocation7 + $0x14] sm:$0xf]
        %v397 = vld [vmem:[#allocation7 + $0x18] sm:$0xf]
        %v398 = vld [vmem:[#allocation7 + $0x1c] sm:$0xf]
        %v399 = vld [vmem:[#allocation2 + $0x8] sm:$0x1]
        %s400 = scalar_lea.vmem [#allocation7], 32
        %v401 = vld [vmem:[%s400] sm:$0xf]
        %v402 = vld [vmem:[%s400 + $0x4] sm:$0xf]
        %v403 = vld [vmem:[%s400 + $0x8] sm:$0xf]
        %v404 = vld [vmem:[%s400 + $0xc] sm:$0xf]
        %v405 = vld [vmem:[%s400 + $0x10] sm:$0xf]
        %v406 = vld [vmem:[%s400 + $0x14] sm:$0xf]
        %v407 = vld [vmem:[%s400 + $0x18] sm:$0xf]
        %v408 = vld [vmem:[%s400 + $0x1c] sm:$0xf]
        %v412 = vunpack.c.l.b16 %v389
        %v413 = vunpack.c.l.b16 %v390
        %v414 = vunpack.c.l.b16 %v399
        %v415 = vpack.c.b16 %v413, %v412
        %v416 = vpack.c.b16 %v414, %v414
        %vm417 = vsmask.f32 7424
        %v419 = vshrl.u32 %v415, 16
        %v421 = vshll.u32 %v415, 16
        %v423 = vrot.slane %v421, 1
        %v424 = vor.u32 %v419, %v423
        %v426 = vshll.u32 %v416, 16
        %v428 = vrot.slane %v426, 1
        %v429 = vsel %vm417, %v424, %v428
        %v438 = vunpack.c.l.b16 %v401
        %v439 = vunpack.c.l.b16 %v402
        %v440 = vunpack.c.l.b16 %v403
        %v441 = vunpack.c.l.b16 %v404
        %v442 = vunpack.c.l.b16 %v405
        %v443 = vunpack.c.l.b16 %v406
        %v444 = vunpack.c.l.b16 %v407
        %v445 = vunpack.c.l.b16 %v408
        %v446 = vpack.c.b16 %v439, %v438
        %v447 = vpack.c.b16 %v441, %v440
        %v448 = vpack.c.b16 %v443, %v442
        %v449 = vpack.c.b16 %v445, %v444
        %vm454 = vcmask 523264
        %v456 = vsel %vm454, %v429, 0
        %458 = vmatprep.subr.bf16.mxu0 0
        %459 = vmatpush1.bf16.msra.mxu0 %v446
        %460 = vmatprep.subr.bf16.mxu0 0
        %461 = vmatpush1.bf16.msra.mxu0 %v447
        %462 = vmatprep.subr.bf16.mxu0 0
        %463 = vmatpush1.bf16.msra.mxu0 %v448
        %464 = vmatprep.subr.bf16.mxu0 0
        %465 = vmatpush1.bf16.msra.mxu0 %v449
        %466 = vmatprep.subr.bf16.mxu0 0
        %467 = vmatpush1.bf16.msra.mxu0 0
        %468 = vmatprep.subr.bf16.mxu0 0
        %469 = vmatpush1.bf16.msra.mxu0 0
        %470 = vmatprep.subr.bf16.mxu0 0
        %471 = vmatpush1.bf16.msra.mxu0 0
        %472 = vmatprep.subr.bf16.mxu0 0
        %473 = vmatpush1.bf16.msra.mxu0 0
        %474 = vmatprep.subr.bf16.mxu0 0
        %475 = vmatpush1.bf16.msra.mxu0 0
        %476 = vmatprep.subr.bf16.mxu0 0
        %477 = vmatpush1.bf16.msra.mxu0 0
        %478 = vmatprep.subr.bf16.mxu0 0
        %479 = vmatpush1.bf16.msra.mxu0 0
        %480 = vmatprep.subr.bf16.mxu0 0
        %481 = vmatpush1.bf16.msra.mxu0 0
        %482 = vmatprep.subr.bf16.mxu0 0
        %483 = vmatpush1.bf16.msra.mxu0 0
        %484 = vmatprep.subr.bf16.mxu0 0
        %485 = vmatpush1.bf16.msra.mxu0 0
        %486 = vmatprep.subr.bf16.mxu0 0
        %487 = vmatpush1.bf16.msra.mxu0 0
        %488 = vmatprep.subr.bf16.mxu0 0
        %489 = vmatpush1.bf16.msra.mxu0 0
        %490 = vmatprep.mubr.bf16.mxu0 0
        %491 = vmatmul.mubr.bf16.gmra.mrb[0].mxu0 %v456
        %v492 = vpop.f32.mrb[0].mxu0
        %v493 = vadd.f32 0.0, %v492
        %v494 = vpop.f32.mrb[0].mxu0
        %v495 = vpop.f32.mrb[0].mxu0
        %v496 = vadd.f32 0.0, %v495
        %v497 = vpop.f32.mrb[0].mxu0
        %498 = vdwg.mxu0
        %v507 = vunpack.c.l.b16 %v391
        %v508 = vunpack.c.l.b16 %v392
        %v509 = vunpack.c.l.b16 %v393
        %v510 = vunpack.c.l.b16 %v394
        %v511 = vunpack.c.l.b16 %v395
        %v512 = vunpack.c.l.b16 %v396
        %v513 = vunpack.c.l.b16 %v397
        %v514 = vunpack.c.l.b16 %v398
        %v515 = vpack.c.b16 %v508, %v507
        %v516 = vpack.c.b16 %v510, %v509
        %v517 = vpack.c.b16 %v512, %v511
        %v518 = vpack.c.b16 %v514, %v513
        %v523 = vsel %vm454, %v415, 0
        %525 = vmatprep.subr.bf16.mxu0 0
        %526 = vmatpush1.bf16.msra.mxu0 %v515
        %527 = vmatprep.subr.bf16.mxu0 0
        %528 = vmatpush1.bf16.msra.mxu0 %v516
        %529 = vmatprep.subr.bf16.mxu0 0
        %530 = vmatpush1.bf16.msra.mxu0 %v517
        %531 = vmatprep.subr.bf16.mxu0 0
        %532 = vmatpush1.bf16.msra.mxu0 %v518
        %533 = vmatprep.subr.bf16.mxu0 0
        %534 = vmatpush1.bf16.msra.mxu0 0
        %535 = vmatprep.subr.bf16.mxu0 0
        %536 = vmatpush1.bf16.msra.mxu0 0
        %537 = vmatprep.subr.bf16.mxu0 0
        %538 = vmatpush1.bf16.msra.mxu0 0
        %539 = vmatprep.subr.bf16.mxu0 0
        %540 = vmatpush1.bf16.msra.mxu0 0
        %541 = vmatprep.subr.bf16.mxu0 0
        %542 = vmatpush1.bf16.msra.mxu0 0
        %543 = vmatprep.subr.bf16.mxu0 0
        %544 = vmatpush1.bf16.msra.mxu0 0
        %545 = vmatprep.subr.bf16.mxu0 0
        %546 = vmatpush1.bf16.msra.mxu0 0
        %547 = vmatprep.subr.bf16.mxu0 0
        %548 = vmatpush1.bf16.msra.mxu0 0
        %549 = vmatprep.subr.bf16.mxu0 0
        %550 = vmatpush1.bf16.msra.mxu0 0
        %551 = vmatprep.subr.bf16.mxu0 0
        %552 = vmatpush1.bf16.msra.mxu0 0
        %553 = vmatprep.subr.bf16.mxu0 0
        %554 = vmatpush1.bf16.msra.mxu0 0
        %555 = vmatprep.subr.bf16.mxu0 0
        %556 = vmatpush1.bf16.msra.mxu0 0
        %557 = vmatprep.mubr.bf16.mxu0 0
        %558 = vmatmul.mubr.bf16.gmra.mrb[0].mxu0 %v523
        %v559 = vpop.f32.mrb[0].mxu0
        %v560 = vadd.f32 %v493, %v559
        %v561 = vpop.f32.mrb[0].mxu0
        %v562 = vpop.f32.mrb[0].mxu0
        %v563 = vadd.f32 %v496, %v562
        %v564 = vpop.f32.mrb[0].mxu0
        %565 = vdwg.mxu0
        %v566 = vld [vmem:[#allocation2] sm:$0xe]
        %s567 = scalar_lea.vmem [#allocation7], 64
        %v568 = vld [vmem:[%s567] sm:$0xf]
        %v569 = vld [vmem:[%s567 + $0x4] sm:$0xf]
        %v570 = vld [vmem:[%s567 + $0x8] sm:$0xf]
        %v571 = vld [vmem:[%s567 + $0xc] sm:$0xf]
        %v572 = vld [vmem:[%s567 + $0x10] sm:$0xf]
        %v573 = vld [vmem:[%s567 + $0x14] sm:$0xf]
        %v574 = vld [vmem:[%s567 + $0x18] sm:$0xf]
        %v575 = vld [vmem:[%s567 + $0x1c] sm:$0xf]
        %v577 = vunpack.c.l.b16 %v566
        %v578 = vpack.c.b16 %v413, %v577
        %vm579 = vcmask 1046528
        %v580 = vrot.slane %v578, 1
        %v581 = vrot.slane %v416, 1
        %v582 = vsel %vm579, %v580, %v581
        %v591 = vunpack.c.l.b16 %v568
        %v592 = vunpack.c.l.b16 %v569
        %v593 = vunpack.c.l.b16 %v570
        %v594 = vunpack.c.l.b16 %v571
        %v595 = vunpack.c.l.b16 %v572
        %v596 = vunpack.c.l.b16 %v573
        %v597 = vunpack.c.l.b16 %v574
        %v598 = vunpack.c.l.b16 %v575
        %v599 = vpack.c.b16 %v592, %v591
        %v600 = vpack.c.b16 %v594, %v593
        %v601 = vpack.c.b16 %v596, %v595
        %v602 = vpack.c.b16 %v598, %v597
        %v608 = vsel %vm454, %v582, 0
        %610 = vmatprep.subr.bf16.mxu0 0
        %611 = vmatpush1.bf16.msra.mxu0 %v599
        %612 = vmatprep.subr.bf16.mxu0 0
        %613 = vmatpush1.bf16.msra.mxu0 %v600
        %614 = vmatprep.subr.bf16.mxu0 0
        %615 = vmatpush1.bf16.msra.mxu0 %v601
        %616 = vmatprep.subr.bf16.mxu0 0
        %617 = vmatpush1.bf16.msra.mxu0 %v602
        %618 = vmatprep.subr.bf16.mxu0 0
        %619 = vmatpush1.bf16.msra.mxu0 0
        %620 = vmatprep.subr.bf16.mxu0 0
        %621 = vmatpush1.bf16.msra.mxu0 0
        %622 = vmatprep.subr.bf16.mxu0 0
        %623 = vmatpush1.bf16.msra.mxu0 0
        %624 = vmatprep.subr.bf16.mxu0 0
        %625 = vmatpush1.bf16.msra.mxu0 0
        %626 = vmatprep.subr.bf16.mxu0 0
        %627 = vmatpush1.bf16.msra.mxu0 0
        %628 = vmatprep.subr.bf16.mxu0 0
        %629 = vmatpush1.bf16.msra.mxu0 0
        %630 = vmatprep.subr.bf16.mxu0 0
        %631 = vmatpush1.bf16.msra.mxu0 0
        %632 = vmatprep.subr.bf16.mxu0 0
        %633 = vmatpush1.bf16.msra.mxu0 0
        %634 = vmatprep.subr.bf16.mxu0 0
        %635 = vmatpush1.bf16.msra.mxu0 0
        %636 = vmatprep.subr.bf16.mxu0 0
        %637 = vmatpush1.bf16.msra.mxu0 0
        %638 = vmatprep.subr.bf16.mxu0 0
        %639 = vmatpush1.bf16.msra.mxu0 0
        %640 = vmatprep.subr.bf16.mxu0 0
        %641 = vmatpush1.bf16.msra.mxu0 0
        %642 = vmatprep.mubr.bf16.mxu0 0
        %643 = vmatmul.mubr.bf16.gmra.mrb[0].mxu0 %v608
        %v644 = vpop.f32.mrb[0].mxu0
        %v645 = vadd.f32 0.0, %v644
        %v646 = vpop.f32.mrb[0].mxu0
        %v647 = vpop.f32.mrb[0].mxu0
        %v648 = vadd.f32 0.0, %v647
        %v649 = vpop.f32.mrb[0].mxu0
        %650 = vdwg.mxu0
        %v651 = vadd.f32 %v560, %v645
        %v652 = vadd.f32 %v563, %v648
        %v653 = vld [vmem:[%s5] sm:$0x1]
        %v654 = vlaneseq
        %v655 = vshrl.u32 %v654, 7
        %v656 = vsub.s32 0, %v655
        %v657 = vrot.slane %v653, %v656
        %v658 = vadd.f32 %v651, %v657
        %v659 = vadd.f32 %v652, %v657
        %v660 = vmax.f32 %v658, 0.0
        %v661 = vmax.f32 %v659, 0.0
        %v662 = vpack.c.bf16 %v661, %v660
        %v664 = vunpack.c.l.b16 %v662
        %v665 = vunpack.c.h.b16 %v662
        %v666 = vpack.c.b16 %v664, %v664
        %v667 = vpack.c.b16 %v665, %v665
        %v669 = vshrl.u32 %v666, 16
        %v671 = vrot.slane %v669, 7
        %v672 = vshll.u32 %v666, 16
        %v674 = vor.u32 %v671, %v672
        %v675 = vrot.slane %v671, 4
        %v677 = vshrl.u32 %v667, 16
        %v679 = vrot.slane %v677, 7
        %v680 = vshll.u32 %v667, 16
        %v682 = vor.u32 %v679, %v680
        %v683 = vsel %vm358, %v675, %v682
        %v684 = vrot.slane %v679, 4
        %vm688 = vcmask 1043456
        %vm689 = vmand %vm688, %vm340
        %v690 = vld [vmem:[#allocation3] sm:$0xf]
        %v691 = vsel %vm689, %v674, %v690
        %692 = vst [vmem:[#allocation3] sm:$0xf] %v691
        %693 = vst [vmem:[#allocation3 + $0x4] sm:$0xf] %v683
        %v694 = vld [vmem:[#allocation3 + $0x8] sm:$0x1]
        %v695 = vsel %vm336, %v684, %v694
        %696 = vst [vmem:[#allocation3 + $0x8] sm:$0x1] %v695
        %v697 = vld [vmem:[#allocation3] sm:$0xf]
        %v698 = vld [vmem:[#allocation3 + $0x4] sm:$0xf]
        %v699 = vld [vmem:[#allocation9] sm:$0xf]
        %v700 = vld [vmem:[#allocation9 + $0x4] sm:$0xf]
        %v701 = vld [vmem:[#allocation9 + $0x8] sm:$0xf]
        %v702 = vld [vmem:[#allocation9 + $0xc] sm:$0xf]
        %v703 = vld [vmem:[#allocation9 + $0x10] sm:$0xf]
        %v704 = vld [vmem:[#allocation9 + $0x14] sm:$0xf]
        %v705 = vld [vmem:[#allocation9 + $0x18] sm:$0xf]
        %v706 = vld [vmem:[#allocation9 + $0x1c] sm:$0xf]
        %v707 = vld [vmem:[#allocation9 + $0x20] sm:$0xf]
        %v708 = vld [vmem:[#allocation9 + $0x24] sm:$0xf]
        %v709 = vld [vmem:[#allocation9 + $0x28] sm:$0xf]
        %v710 = vld [vmem:[#allocation9 + $0x2c] sm:$0xf]
        %v711 = vld [vmem:[#allocation9 + $0x30] sm:$0xf]
        %v712 = vld [vmem:[#allocation9 + $0x34] sm:$0xf]
        %v713 = vld [vmem:[#allocation9 + $0x38] sm:$0xf]
        %v714 = vld [vmem:[#allocation9 + $0x3c] sm:$0xf]
        %v715 = vld [vmem:[#allocation3 + $0x8] sm:$0x1]
        %s716 = scalar_lea.vmem [#allocation9], 64
        %v717 = vld [vmem:[%s716] sm:$0xf]
        %v718 = vld [vmem:[%s716 + $0x4] sm:$0xf]
        %v719 = vld [vmem:[%s716 + $0x8] sm:$0xf]
        %v720 = vld [vmem:[%s716 + $0xc] sm:$0xf]
        %v721 = vld [vmem:[%s716 + $0x10] sm:$0xf]
        %v722 = vld [vmem:[%s716 + $0x14] sm:$0xf]
        %v723 = vld [vmem:[%s716 + $0x18] sm:$0xf]
        %v724 = vld [vmem:[%s716 + $0x1c] sm:$0xf]
        %v725 = vld [vmem:[%s716 + $0x20] sm:$0xf]
        %v726 = vld [vmem:[%s716 + $0x24] sm:$0xf]
        %v727 = vld [vmem:[%s716 + $0x28] sm:$0xf]
        %v728 = vld [vmem:[%s716 + $0x2c] sm:$0xf]
        %v729 = vld [vmem:[%s716 + $0x30] sm:$0xf]
        %v730 = vld [vmem:[%s716 + $0x34] sm:$0xf]
        %v731 = vld [vmem:[%s716 + $0x38] sm:$0xf]
        %v732 = vld [vmem:[%s716 + $0x3c] sm:$0xf]
        %v736 = vunpack.c.l.b16 %v697
        %v737 = vunpack.c.l.b16 %v698
        %v738 = vunpack.c.l.b16 %v715
        %v739 = vpack.c.b16 %v737, %v736
        %v740 = vpack.c.b16 %v738, %v738
        %v742 = vshrl.u32 %v739, 16
        %v744 = vshll.u32 %v739, 16
        %v746 = vrot.slane %v744, 1
        %v747 = vor.u32 %v742, %v746
        %v749 = vshll.u32 %v740, 16
        %v751 = vrot.slane %v749, 1
        %v752 = vsel %vm417, %v747, %v751
        %v770 = vunpack.c.l.b16 %v717
        %v771 = vunpack.c.l.b16 %v718
        %v772 = vunpack.c.l.b16 %v719
        %v773 = vunpack.c.l.b16 %v720
        %v774 = vunpack.c.l.b16 %v721
        %v775 = vunpack.c.l.b16 %v722
        %v776 = vunpack.c.l.b16 %v723
        %v777 = vunpack.c.l.b16 %v724
        %v778 = vunpack.c.l.b16 %v725
        %v779 = vunpack.c.l.b16 %v726
        %v780 = vunpack.c.l.b16 %v727
        %v781 = vunpack.c.l.b16 %v728
        %v782 = vunpack.c.l.b16 %v729
        %v783 = vunpack.c.l.b16 %v730
        %v784 = vunpack.c.l.b16 %v731
        %v785 = vunpack.c.l.b16 %v732
        %v786 = vpack.c.b16 %v771, %v770
        %v787 = vpack.c.b16 %v773, %v772
        %v788 = vpack.c.b16 %v775, %v774
        %v789 = vpack.c.b16 %v777, %v776
        %v790 = vpack.c.b16 %v779, %v778
        %v791 = vpack.c.b16 %v781, %v780
        %v792 = vpack.c.b16 %v783, %v782
        %v793 = vpack.c.b16 %v785, %v784
        %802 = vmatprep.subr.bf16.mxu0 0
        %803 = vmatpush1.bf16.msra.mxu0 %v786
        %804 = vmatprep.subr.bf16.mxu0 0
        %805 = vmatpush1.bf16.msra.mxu0 %v787
        %806 = vmatprep.subr.bf16.mxu0 0
        %807 = vmatpush1.bf16.msra.mxu0 %v788
        %808 = vmatprep.subr.bf16.mxu0 0
        %809 = vmatpush1.bf16.msra.mxu0 %v789
        %810 = vmatprep.subr.bf16.mxu0 0
        %811 = vmatpush1.bf16.msra.mxu0 %v790
        %812 = vmatprep.subr.bf16.mxu0 0
        %813 = vmatpush1.bf16.msra.mxu0 %v791
        %814 = vmatprep.subr.bf16.mxu0 0
        %815 = vmatpush1.bf16.msra.mxu0 %v792
        %816 = vmatprep.subr.bf16.mxu0 0
        %817 = vmatpush1.bf16.msra.mxu0 %v793
        %818 = vmatprep.subr.bf16.mxu0 0
        %819 = vmatpush1.bf16.msra.mxu0 0
        %820 = vmatprep.subr.bf16.mxu0 0
        %821 = vmatpush1.bf16.msra.mxu0 0
        %822 = vmatprep.subr.bf16.mxu0 0
        %823 = vmatpush1.bf16.msra.mxu0 0
        %824 = vmatprep.subr.bf16.mxu0 0
        %825 = vmatpush1.bf16.msra.mxu0 0
        %826 = vmatprep.subr.bf16.mxu0 0
        %827 = vmatpush1.bf16.msra.mxu0 0
        %828 = vmatprep.subr.bf16.mxu0 0
        %829 = vmatpush1.bf16.msra.mxu0 0
        %830 = vmatprep.subr.bf16.mxu0 0
        %831 = vmatpush1.bf16.msra.mxu0 0
        %832 = vmatprep.subr.bf16.mxu0 0
        %833 = vmatpush1.bf16.msra.mxu0 0
        %834 = vmatprep.mubr.bf16.mxu0 0
        %835 = vmatmul.mubr.bf16.gmra.mrb[0].mxu0 %v752
        %v836 = vpop.f32.mrb[0].mxu0
        %v837 = vadd.f32 0.0, %v836
        %v838 = vpop.f32.mrb[0].mxu0
        %v839 = vpop.f32.mrb[0].mxu0
        %v840 = vadd.f32 0.0, %v839
        %v841 = vpop.f32.mrb[0].mxu0
        %842 = vdwg.mxu0
        %v860 = vunpack.c.l.b16 %v699
        %v861 = vunpack.c.l.b16 %v700
        %v862 = vunpack.c.l.b16 %v701
        %v863 = vunpack.c.l.b16 %v702
        %v864 = vunpack.c.l.b16 %v703
        %v865 = vunpack.c.l.b16 %v704
        %v866 = vunpack.c.l.b16 %v705
        %v867 = vunpack.c.l.b16 %v706
        %v868 = vunpack.c.l.b16 %v707
        %v869 = vunpack.c.l.b16 %v708
        %v870 = vunpack.c.l.b16 %v709
        %v871 = vunpack.c.l.b16 %v710
        %v872 = vunpack.c.l.b16 %v711
        %v873 = vunpack.c.l.b16 %v712
        %v874 = vunpack.c.l.b16 %v713
        %v875 = vunpack.c.l.b16 %v714
        %v876 = vpack.c.b16 %v861, %v860
        %v877 = vpack.c.b16 %v863, %v862
        %v878 = vpack.c.b16 %v865, %v864
        %v879 = vpack.c.b16 %v867, %v866
        %v880 = vpack.c.b16 %v869, %v868
        %v881 = vpack.c.b16 %v871, %v870
        %v882 = vpack.c.b16 %v873, %v872
        %v883 = vpack.c.b16 %v875, %v874
        %892 = vmatprep.subr.bf16.mxu0 0
        %893 = vmatpush1.bf16.msra.mxu0 %v876
        %894 = vmatprep.subr.bf16.mxu0 0
        %895 = vmatpush1.bf16.msra.mxu0 %v877
        %896 = vmatprep.subr.bf16.mxu0 0
        %897 = vmatpush1.bf16.msra.mxu0 %v878
        %898 = vmatprep.subr.bf16.mxu0 0
        %899 = vmatpush1.bf16.msra.mxu0 %v879
        %900 = vmatprep.subr.bf16.mxu0 0
        %901 = vmatpush1.bf16.msra.mxu0 %v880
        %902 = vmatprep.subr.bf16.mxu0 0
        %903 = vmatpush1.bf16.msra.mxu0 %v881
        %904 = vmatprep.subr.bf16.mxu0 0
        %905 = vmatpush1.bf16.msra.mxu0 %v882
        %906 = vmatprep.subr.bf16.mxu0 0
        %907 = vmatpush1.bf16.msra.mxu0 %v883
        %908 = vmatprep.subr.bf16.mxu0 0
        %909 = vmatpush1.bf16.msra.mxu0 0
        %910 = vmatprep.subr.bf16.mxu0 0
        %911 = vmatpush1.bf16.msra.mxu0 0
        %912 = vmatprep.subr.bf16.mxu0 0
        %913 = vmatpush1.bf16.msra.mxu0 0
        %914 = vmatprep.subr.bf16.mxu0 0
        %915 = vmatpush1.bf16.msra.mxu0 0
        %916 = vmatprep.subr.bf16.mxu0 0
        %917 = vmatpush1.bf16.msra.mxu0 0
        %918 = vmatprep.subr.bf16.mxu0 0
        %919 = vmatpush1.bf16.msra.mxu0 0
        %920 = vmatprep.subr.bf16.mxu0 0
        %921 = vmatpush1.bf16.msra.mxu0 0
        %922 = vmatprep.subr.bf16.mxu0 0
        %923 = vmatpush1.bf16.msra.mxu0 0
        %924 = vmatprep.mubr.bf16.mxu0 0
        %925 = vmatmul.mubr.bf16.gmra.mrb[0].mxu0 %v739
        %v926 = vpop.f32.mrb[0].mxu0
        %v927 = vadd.f32 %v837, %v926
        %v928 = vpop.f32.mrb[0].mxu0
        %v929 = vpop.f32.mrb[0].mxu0
        %v930 = vadd.f32 %v840, %v929
        %v931 = vpop.f32.mrb[0].mxu0
        %932 = vdwg.mxu0
        %v933 = vld [vmem:[#allocation3] sm:$0xe]
        %s934 = scalar_lea.vmem [#allocation9], 128
        %v935 = vld [vmem:[%s934] sm:$0xf]
        %v936 = vld [vmem:[%s934 + $0x4] sm:$0xf]
        %v937 = vld [vmem:[%s934 + $0x8] sm:$0xf]
        %v938 = vld [vmem:[%s934 + $0xc] sm:$0xf]
        %v939 = vld [vmem:[%s934 + $0x10] sm:$0xf]
        %v940 = vld [vmem:[%s934 + $0x14] sm:$0xf]
        %v941 = vld [vmem:[%s934 + $0x18] sm:$0xf]
        %v942 = vld [vmem:[%s934 + $0x1c] sm:$0xf]
        %v943 = vld [vmem:[%s934 + $0x20] sm:$0xf]
        %v944 = vld [vmem:[%s934 + $0x24] sm:$0xf]
        %v945 = vld [vmem:[%s934 + $0x28] sm:$0xf]
        %v946 = vld [vmem:[%s934 + $0x2c] sm:$0xf]
        %v947 = vld [vmem:[%s934 + $0x30] sm:$0xf]
        %v948 = vld [vmem:[%s934 + $0x34] sm:$0xf]
        %v949 = vld [vmem:[%s934 + $0x38] sm:$0xf]
        %v950 = vld [vmem:[%s934 + $0x3c] sm:$0xf]
        %v952 = vunpack.c.l.b16 %v933
        %v953 = vpack.c.b16 %v737, %v952
        %v954 = vrot.slane %v953, 1
        %v955 = vrot.slane %v740, 1
        %v956 = vsel %vm579, %v954, %v955
        %v974 = vunpack.c.l.b16 %v935
        %v975 = vunpack.c.l.b16 %v936
        %v976 = vunpack.c.l.b16 %v937
        %v977 = vunpack.c.l.b16 %v938
        %v978 = vunpack.c.l.b16 %v939
        %v979 = vunpack.c.l.b16 %v940
        %v980 = vunpack.c.l.b16 %v941
        %v981 = vunpack.c.l.b16 %v942
        %v982 = vunpack.c.l.b16 %v943
        %v983 = vunpack.c.l.b16 %v944
        %v984 = vunpack.c.l.b16 %v945
        %v985 = vunpack.c.l.b16 %v946
        %v986 = vunpack.c.l.b16 %v947
        %v987 = vunpack.c.l.b16 %v948
        %v988 = vunpack.c.l.b16 %v949
        %v989 = vunpack.c.l.b16 %v950
        %v990 = vpack.c.b16 %v975, %v974
        %v991 = vpack.c.b16 %v977, %v976
        %v992 = vpack.c.b16 %v979, %v978
        %v993 = vpack.c.b16 %v981, %v980
        %v994 = vpack.c.b16 %v983, %v982
        %v995 = vpack.c.b16 %v985, %v984
        %v996 = vpack.c.b16 %v987, %v986
        %v997 = vpack.c.b16 %v989, %v988
        %1006 = vmatprep.subr.bf16.mxu0 0
        %1007 = vmatpush1.bf16.msra.mxu0 %v990
        %1008 = vmatprep.subr.bf16.mxu0 0
        %1009 = vmatpush1.bf16.msra.mxu0 %v991
        %1010 = vmatprep.subr.bf16.mxu0 0
        %1011 = vmatpush1.bf16.msra.mxu0 %v992
        %1012 = vmatprep.subr.bf16.mxu0 0
        %1013 = vmatpush1.bf16.msra.mxu0 %v993
        %1014 = vmatprep.subr.bf16.mxu0 0
        %1015 = vmatpush1.bf16.msra.mxu0 %v994
        %1016 = vmatprep.subr.bf16.mxu0 0
        %1017 = vmatpush1.bf16.msra.mxu0 %v995
        %1018 = vmatprep.subr.bf16.mxu0 0
        %1019 = vmatpush1.bf16.msra.mxu0 %v996
        %1020 = vmatprep.subr.bf16.mxu0 0
        %1021 = vmatpush1.bf16.msra.mxu0 %v997
        %1022 = vmatprep.subr.bf16.mxu0 0
        %1023 = vmatpush1.bf16.msra.mxu0 0
        %1024 = vmatprep.subr.bf16.mxu0 0
        %1025 = vmatpush1.bf16.msra.mxu0 0
        %1026 = vmatprep.subr.bf16.mxu0 0
        %1027 = vmatpush1.bf16.msra.mxu0 0
        %1028 = vmatprep.subr.bf16.mxu0 0
        %1029 = vmatpush1.bf16.msra.mxu0 0
        %1030 = vmatprep.subr.bf16.mxu0 0
        %1031 = vmatpush1.bf16.msra.mxu0 0
        %1032 = vmatprep.subr.bf16.mxu0 0
        %1033 = vmatpush1.bf16.msra.mxu0 0
        %1034 = vmatprep.subr.bf16.mxu0 0
        %1035 = vmatpush1.bf16.msra.mxu0 0
        %1036 = vmatprep.subr.bf16.mxu0 0
        %1037 = vmatpush1.bf16.msra.mxu0 0
        %1038 = vmatprep.mubr.bf16.mxu0 0
        %1039 = vmatmul.mubr.bf16.gmra.mrb[0].mxu0 %v956
        %v1040 = vpop.f32.mrb[0].mxu0
        %v1041 = vadd.f32 0.0, %v1040
        %v1042 = vpop.f32.mrb[0].mxu0
        %v1043 = vpop.f32.mrb[0].mxu0
        %v1044 = vadd.f32 0.0, %v1043
        %v1045 = vpop.f32.mrb[0].mxu0
        %1046 = vdwg.mxu0
        %v1047 = vadd.f32 %v927, %v1041
        %v1048 = vadd.f32 %v930, %v1044
        %v1049 = vld [vmem:[%s5 + $0x1] sm:$0x1]
        %v1050 = vlaneseq
        %v1051 = vshrl.u32 %v1050, 7
        %v1052 = vsub.s32 0, %v1051
        %v1053 = vrot.slane %v1049, %v1052
        %v1054 = vadd.f32 %v1047, %v1053
        %v1055 = vadd.f32 %v1048, %v1053
        %v1056 = vmax.f32 %v1054, 0.0
        %v1057 = vmax.f32 %v1055, 0.0
        %v1058 = vpack.c.bf16 %v1057, %v1056
        %v1060 = vunpack.c.l.b16 %v1058
        %v1061 = vunpack.c.h.b16 %v1058
        %v1062 = vpack.c.b16 %v1060, %v1060
        %v1063 = vpack.c.b16 %v1061, %v1061
        %v1065 = vshrl.u32 %v1062, 16
        %v1067 = vrot.slane %v1065, 7
        %v1068 = vshll.u32 %v1062, 16
        %v1070 = vor.u32 %v1067, %v1068
        %v1071 = vrot.slane %v1067, 4
        %v1073 = vshrl.u32 %v1063, 16
        %v1075 = vrot.slane %v1073, 7
        %v1076 = vshll.u32 %v1063, 16
        %v1078 = vor.u32 %v1075, %v1076
        %v1079 = vsel %vm358, %v1071, %v1078
        %v1080 = vrot.slane %v1075, 4
        %v1084 = vsel %vm689, %v1070, %v697
        %1085 = vst [vmem:[#allocation3] sm:$0xf] %v1084
        %1086 = vst [vmem:[#allocation3 + $0x4] sm:$0xf] %v1079
        %v1087 = vld [vmem:[#allocation3 + $0x8] sm:$0x1]
        %v1088 = vsel %vm336, %v1080, %v1087
        %1089 = vst [vmem:[#allocation3 + $0x8] sm:$0x1] %v1088
        %v1090 = vld [vmem:[#allocation3] sm:$0xf]
        %v1091 = vld [vmem:[#allocation3 + $0x4] sm:$0xf]
        %v1092 = vld [vmem:[#allocation10] sm:$0xf]
        %v1093 = vld [vmem:[#allocation10 + $0x4] sm:$0xf]
        %v1094 = vld [vmem:[#allocation10 + $0x8] sm:$0xf]
        %v1095 = vld [vmem:[#allocation10 + $0xc] sm:$0xf]
        %v1096 = vld [vmem:[#allocation10 + $0x10] sm:$0xf]
        %v1097 = vld [vmem:[#allocation10 + $0x14] sm:$0xf]
        %v1098 = vld [vmem:[#allocation10 + $0x18] sm:$0xf]
        %v1099 = vld [vmem:[#allocation10 + $0x1c] sm:$0xf]
        %v1100 = vld [vmem:[#allocation10 + $0x20] sm:$0xf]
        %v1101 = vld [vmem:[#allocation10 + $0x24] sm:$0xf]
        %v1102 = vld [vmem:[#allocation10 + $0x28] sm:$0xf]
        %v1103 = vld [vmem:[#allocation10 + $0x2c] sm:$0xf]
        %v1104 = vld [vmem:[#allocation10 + $0x30] sm:$0xf]
        %v1105 = vld [vmem:[#allocation10 + $0x34] sm:$0xf]
        %v1106 = vld [vmem:[#allocation10 + $0x38] sm:$0xf]
        %v1107 = vld [vmem:[#allocation10 + $0x3c] sm:$0xf]
        %v1108 = vld [vmem:[#allocation3 + $0x8] sm:$0x1]
        %s1109 = scalar_lea.vmem [#allocation10], 64
        %v1110 = vld [vmem:[%s1109] sm:$0xf]
        %v1111 = vld [vmem:[%s1109 + $0x4] sm:$0xf]
        %v1112 = vld [vmem:[%s1109 + $0x8] sm:$0xf]
        %v1113 = vld [vmem:[%s1109 + $0xc] sm:$0xf]
        %v1114 = vld [vmem:[%s1109 + $0x10] sm:$0xf]
        %v1115 = vld [vmem:[%s1109 + $0x14] sm:$0xf]
        %v1116 = vld [vmem:[%s1109 + $0x18] sm:$0xf]
        %v1117 = vld [vmem:[%s1109 + $0x1c] sm:$0xf]
        %v1118 = vld [vmem:[%s1109 + $0x20] sm:$0xf]
        %v1119 = vld [vmem:[%s1109 + $0x24] sm:$0xf]
        %v1120 = vld [vmem:[%s1109 + $0x28] sm:$0xf]
        %v1121 = vld [vmem:[%s1109 + $0x2c] sm:$0xf]
        %v1122 = vld [vmem:[%s1109 + $0x30] sm:$0xf]
        %v1123 = vld [vmem:[%s1109 + $0x34] sm:$0xf]
        %v1124 = vld [vmem:[%s1109 + $0x38] sm:$0xf]
        %v1125 = vld [vmem:[%s1109 + $0x3c] sm:$0xf]
        %v1129 = vunpack.c.l.b16 %v1090
        %v1130 = vunpack.c.l.b16 %v1091
        %v1131 = vunpack.c.l.b16 %v1108
        %v1132 = vpack.c.b16 %v1130, %v1129
        %v1133 = vpack.c.b16 %v1131, %v1131
        %v1135 = vshrl.u32 %v1132, 16
        %v1137 = vshll.u32 %v1132, 16
        %v1139 = vrot.slane %v1137, 1
        %v1140 = vor.u32 %v1135, %v1139
        %v1142 = vshll.u32 %v1133, 16
        %v1144 = vrot.slane %v1142, 1
        %v1145 = vsel %vm417, %v1140, %v1144
        %v1163 = vunpack.c.l.b16 %v1110
        %v1164 = vunpack.c.l.b16 %v1111
        %v1165 = vunpack.c.l.b16 %v1112
        %v1166 = vunpack.c.l.b16 %v1113
        %v1167 = vunpack.c.l.b16 %v1114
        %v1168 = vunpack.c.l.b16 %v1115
        %v1169 = vunpack.c.l.b16 %v1116
        %v1170 = vunpack.c.l.b16 %v1117
        %v1171 = vunpack.c.l.b16 %v1118
        %v1172 = vunpack.c.l.b16 %v1119
        %v1173 = vunpack.c.l.b16 %v1120
        %v1174 = vunpack.c.l.b16 %v1121
        %v1175 = vunpack.c.l.b16 %v1122
        %v1176 = vunpack.c.l.b16 %v1123
        %v1177 = vunpack.c.l.b16 %v1124
        %v1178 = vunpack.c.l.b16 %v1125
        %v1179 = vpack.c.b16 %v1164, %v1163
        %v1180 = vpack.c.b16 %v1166, %v1165
        %v1181 = vpack.c.b16 %v1168, %v1167
        %v1182 = vpack.c.b16 %v1170, %v1169
        %v1183 = vpack.c.b16 %v1172, %v1171
        %v1184 = vpack.c.b16 %v1174, %v1173
        %v1185 = vpack.c.b16 %v1176, %v1175
        %v1186 = vpack.c.b16 %v1178, %v1177
        %1195 = vmatprep.subr.bf16.mxu0 0
        %1196 = vmatpush1.bf16.msra.mxu0 %v1179
        %1197 = vmatprep.subr.bf16.mxu0 0
        %1198 = vmatpush1.bf16.msra.mxu0 %v1180
        %1199 = vmatprep.subr.bf16.mxu0 0
        %1200 = vmatpush1.bf16.msra.mxu0 %v1181
        %1201 = vmatprep.subr.bf16.mxu0 0
        %1202 = vmatpush1.bf16.msra.mxu0 %v1182
        %1203 = vmatprep.subr.bf16.mxu0 0
        %1204 = vmatpush1.bf16.msra.mxu0 %v1183
        %1205 = vmatprep.subr.bf16.mxu0 0
        %1206 = vmatpush1.bf16.msra.mxu0 %v1184
        %1207 = vmatprep.subr.bf16.mxu0 0
        %1208 = vmatpush1.bf16.msra.mxu0 %v1185
        %1209 = vmatprep.subr.bf16.mxu0 0
        %1210 = vmatpush1.bf16.msra.mxu0 %v1186
        %1211 = vmatprep.subr.bf16.mxu0 0
        %1212 = vmatpush1.bf16.msra.mxu0 0
        %1213 = vmatprep.subr.bf16.mxu0 0
        %1214 = vmatpush1.bf16.msra.mxu0 0
        %1215 = vmatprep.subr.bf16.mxu0 0
        %1216 = vmatpush1.bf16.msra.mxu0 0
        %1217 = vmatprep.subr.bf16.mxu0 0
        %1218 = vmatpush1.bf16.msra.mxu0 0
        %1219 = vmatprep.subr.bf16.mxu0 0
        %1220 = vmatpush1.bf16.msra.mxu0 0
        %1221 = vmatprep.subr.bf16.mxu0 0
        %1222 = vmatpush1.bf16.msra.mxu0 0
        %1223 = vmatprep.subr.bf16.mxu0 0
        %1224 = vmatpush1.bf16.msra.mxu0 0
        %1225 = vmatprep.subr.bf16.mxu0 0
        %1226 = vmatpush1.bf16.msra.mxu0 0
        %1227 = vmatprep.mubr.bf16.mxu0 0
        %1228 = vmatmul.mubr.bf16.gmra.mrb[0].mxu0 %v1145
        %v1229 = vpop.f32.mrb[0].mxu0
        %v1230 = vadd.f32 0.0, %v1229
        %v1231 = vpop.f32.mrb[0].mxu0
        %v1232 = vpop.f32.mrb[0].mxu0
        %v1233 = vadd.f32 0.0, %v1232
        %v1234 = vpop.f32.mrb[0].mxu0
        %1235 = vdwg.mxu0
        %v1253 = vunpack.c.l.b16 %v1092
        %v1254 = vunpack.c.l.b16 %v1093
        %v1255 = vunpack.c.l.b16 %v1094
        %v1256 = vunpack.c.l.b16 %v1095
        %v1257 = vunpack.c.l.b16 %v1096
        %v1258 = vunpack.c.l.b16 %v1097
        %v1259 = vunpack.c.l.b16 %v1098
        %v1260 = vunpack.c.l.b16 %v1099
        %v1261 = vunpack.c.l.b16 %v1100
        %v1262 = vunpack.c.l.b16 %v1101
        %v1263 = vunpack.c.l.b16 %v1102
        %v1264 = vunpack.c.l.b16 %v1103
        %v1265 = vunpack.c.l.b16 %v1104
        %v1266 = vunpack.c.l.b16 %v1105
        %v1267 = vunpack.c.l.b16 %v1106
        %v1268 = vunpack.c.l.b16 %v1107
        %v1269 = vpack.c.b16 %v1254, %v1253
        %v1270 = vpack.c.b16 %v1256, %v1255
        %v1271 = vpack.c.b16 %v1258, %v1257
        %v1272 = vpack.c.b16 %v1260, %v1259
        %v1273 = vpack.c.b16 %v1262, %v1261
        %v1274 = vpack.c.b16 %v1264, %v1263
        %v1275 = vpack.c.b16 %v1266, %v1265
        %v1276 = vpack.c.b16 %v1268, %v1267
        %1285 = vmatprep.subr.bf16.mxu0 0
        %1286 = vmatpush1.bf16.msra.mxu0 %v1269
        %1287 = vmatprep.subr.bf16.mxu0 0
        %1288 = vmatpush1.bf16.msra.mxu0 %v1270
        %1289 = vmatprep.subr.bf16.mxu0 0
        %1290 = vmatpush1.bf16.msra.mxu0 %v1271
        %1291 = vmatprep.subr.bf16.mxu0 0
        %1292 = vmatpush1.bf16.msra.mxu0 %v1272
        %1293 = vmatprep.subr.bf16.mxu0 0
        %1294 = vmatpush1.bf16.msra.mxu0 %v1273
        %1295 = vmatprep.subr.bf16.mxu0 0
        %1296 = vmatpush1.bf16.msra.mxu0 %v1274
        %1297 = vmatprep.subr.bf16.mxu0 0
        %1298 = vmatpush1.bf16.msra.mxu0 %v1275
        %1299 = vmatprep.subr.bf16.mxu0 0
        %1300 = vmatpush1.bf16.msra.mxu0 %v1276
        %1301 = vmatprep.subr.bf16.mxu0 0
        %1302 = vmatpush1.bf16.msra.mxu0 0
        %1303 = vmatprep.subr.bf16.mxu0 0
        %1304 = vmatpush1.bf16.msra.mxu0 0
        %1305 = vmatprep.subr.bf16.mxu0 0
        %1306 = vmatpush1.bf16.msra.mxu0 0
        %1307 = vmatprep.subr.bf16.mxu0 0
        %1308 = vmatpush1.bf16.msra.mxu0 0
        %1309 = vmatprep.subr.bf16.mxu0 0
        %1310 = vmatpush1.bf16.msra.mxu0 0
        %1311 = vmatprep.subr.bf16.mxu0 0
        %1312 = vmatpush1.bf16.msra.mxu0 0
        %1313 = vmatprep.subr.bf16.mxu0 0
        %1314 = vmatpush1.bf16.msra.mxu0 0
        %1315 = vmatprep.subr.bf16.mxu0 0
        %1316 = vmatpush1.bf16.msra.mxu0 0
        %1317 = vmatprep.mubr.bf16.mxu0 0
        %1318 = vmatmul.mubr.bf16.gmra.mrb[0].mxu0 %v1132
        %v1319 = vpop.f32.mrb[0].mxu0
        %v1320 = vadd.f32 %v1230, %v1319
        %v1321 = vpop.f32.mrb[0].mxu0
        %v1322 = vpop.f32.mrb[0].mxu0
        %v1323 = vadd.f32 %v1233, %v1322
        %v1324 = vpop.f32.mrb[0].mxu0
        %1325 = vdwg.mxu0
        %v1326 = vld [vmem:[#allocation3] sm:$0xe]
        %s1327 = scalar_lea.vmem [#allocation10], 128
        %v1328 = vld [vmem:[%s1327] sm:$0xf]
        %v1329 = vld [vmem:[%s1327 + $0x4] sm:$0xf]
        %v1330 = vld [vmem:[%s1327 + $0x8] sm:$0xf]
        %v1331 = vld [vmem:[%s1327 + $0xc] sm:$0xf]
        %v1332 = vld [vmem:[%s1327 + $0x10] sm:$0xf]
        %v1333 = vld [vmem:[%s1327 + $0x14] sm:$0xf]
        %v1334 = vld [vmem:[%s1327 + $0x18] sm:$0xf]
        %v1335 = vld [vmem:[%s1327 + $0x1c] sm:$0xf]
        %v1336 = vld [vmem:[%s1327 + $0x20] sm:$0xf]
        %v1337 = vld [vmem:[%s1327 + $0x24] sm:$0xf]
        %v1338 = vld [vmem:[%s1327 + $0x28] sm:$0xf]
        %v1339 = vld [vmem:[%s1327 + $0x2c] sm:$0xf]
        %v1340 = vld [vmem:[%s1327 + $0x30] sm:$0xf]
        %v1341 = vld [vmem:[%s1327 + $0x34] sm:$0xf]
        %v1342 = vld [vmem:[%s1327 + $0x38] sm:$0xf]
        %v1343 = vld [vmem:[%s1327 + $0x3c] sm:$0xf]
        %v1345 = vunpack.c.l.b16 %v1326
        %v1346 = vpack.c.b16 %v1130, %v1345
        %v1347 = vrot.slane %v1346, 1
        %v1348 = vrot.slane %v1133, 1
        %v1349 = vsel %vm579, %v1347, %v1348
        %v1367 = vunpack.c.l.b16 %v1328
        %v1368 = vunpack.c.l.b16 %v1329
        %v1369 = vunpack.c.l.b16 %v1330
        %v1370 = vunpack.c.l.b16 %v1331
        %v1371 = vunpack.c.l.b16 %v1332
        %v1372 = vunpack.c.l.b16 %v1333
        %v1373 = vunpack.c.l.b16 %v1334
        %v1374 = vunpack.c.l.b16 %v1335
        %v1375 = vunpack.c.l.b16 %v1336
        %v1376 = vunpack.c.l.b16 %v1337
        %v1377 = vunpack.c.l.b16 %v1338
        %v1378 = vunpack.c.l.b16 %v1339
        %v1379 = vunpack.c.l.b16 %v1340
        %v1380 = vunpack.c.l.b16 %v1341
        %v1381 = vunpack.c.l.b16 %v1342
        %v1382 = vunpack.c.l.b16 %v1343
        %v1383 = vpack.c.b16 %v1368, %v1367
        %v1384 = vpack.c.b16 %v1370, %v1369
        %v1385 = vpack.c.b16 %v1372, %v1371
        %v1386 = vpack.c.b16 %v1374, %v1373
        %v1387 = vpack.c.b16 %v1376, %v1375
        %v1388 = vpack.c.b16 %v1378, %v1377
        %v1389 = vpack.c.b16 %v1380, %v1379
        %v1390 = vpack.c.b16 %v1382, %v1381
        %1399 = vmatprep.subr.bf16.mxu0 0
        %1400 = vmatpush1.bf16.msra.mxu0 %v1383
        %1401 = vmatprep.subr.bf16.mxu0 0
        %1402 = vmatpush1.bf16.msra.mxu0 %v1384
        %1403 = vmatprep.subr.bf16.mxu0 0
        %1404 = vmatpush1.bf16.msra.mxu0 %v1385
        %1405 = vmatprep.subr.bf16.mxu0 0
        %1406 = vmatpush1.bf16.msra.mxu0 %v1386
        %1407 = vmatprep.subr.bf16.mxu0 0
        %1408 = vmatpush1.bf16.msra.mxu0 %v1387
        %1409 = vmatprep.subr.bf16.mxu0 0
        %1410 = vmatpush1.bf16.msra.mxu0 %v1388
        %1411 = vmatprep.subr.bf16.mxu0 0
        %1412 = vmatpush1.bf16.msra.mxu0 %v1389
        %1413 = vmatprep.subr.bf16.mxu0 0
        %1414 = vmatpush1.bf16.msra.mxu0 %v1390
        %1415 = vmatprep.subr.bf16.mxu0 0
        %1416 = vmatpush1.bf16.msra.mxu0 0
        %1417 = vmatprep.subr.bf16.mxu0 0
        %1418 = vmatpush1.bf16.msra.mxu0 0
        %1419 = vmatprep.subr.bf16.mxu0 0
        %1420 = vmatpush1.bf16.msra.mxu0 0
        %1421 = vmatprep.subr.bf16.mxu0 0
        %1422 = vmatpush1.bf16.msra.mxu0 0
        %1423 = vmatprep.subr.bf16.mxu0 0
        %1424 = vmatpush1.bf16.msra.mxu0 0
        %1425 = vmatprep.subr.bf16.mxu0 0
        %1426 = vmatpush1.bf16.msra.mxu0 0
        %1427 = vmatprep.subr.bf16.mxu0 0
        %1428 = vmatpush1.bf16.msra.mxu0 0
        %1429 = vmatprep.subr.bf16.mxu0 0
        %1430 = vmatpush1.bf16.msra.mxu0 0
        %1431 = vmatprep.mubr.bf16.mxu0 0
        %1432 = vmatmul.mubr.bf16.gmra.mrb[0].mxu0 %v1349
        %v1433 = vpop.f32.mrb[0].mxu0
        %v1434 = vadd.f32 0.0, %v1433
        %v1435 = vpop.f32.mrb[0].mxu0
        %v1436 = vpop.f32.mrb[0].mxu0
        %v1437 = vadd.f32 0.0, %v1436
        %v1438 = vpop.f32.mrb[0].mxu0
        %1439 = vdwg.mxu0
        %v1440 = vadd.f32 %v1320, %v1434
        %v1441 = vadd.f32 %v1323, %v1437
        %v1442 = vld [vmem:[%s5 + $0x2] sm:$0x1]
        %v1443 = vlaneseq
        %v1444 = vshrl.u32 %v1443, 7
        %v1445 = vsub.s32 0, %v1444
        %v1446 = vrot.slane %v1442, %v1445
        %v1447 = vadd.f32 %v1440, %v1446
        %v1448 = vadd.f32 %v1441, %v1446
        %v1449 = vmax.f32 %v1447, 0.0
        %v1450 = vmax.f32 %v1448, 0.0
        %v1451 = vpack.c.bf16 %v1450, %v1449
        %v1453 = vunpack.c.l.b16 %v1451
        %v1454 = vunpack.c.h.b16 %v1451
        %v1455 = vpack.c.b16 %v1453, %v1453
        %v1456 = vpack.c.b16 %v1454, %v1454
        %v1458 = vshrl.u32 %v1455, 16
        %v1460 = vrot.slane %v1458, 7
        %v1461 = vshll.u32 %v1455, 16
        %v1463 = vor.u32 %v1460, %v1461
        %v1464 = vrot.slane %v1460, 4
        %v1466 = vshrl.u32 %v1456, 16
        %v1468 = vrot.slane %v1466, 7
        %v1469 = vshll.u32 %v1456, 16
        %v1471 = vor.u32 %v1468, %v1469
        %v1472 = vsel %vm358, %v1464, %v1471
        %v1473 = vrot.slane %v1468, 4
        %v1477 = vsel %vm689, %v1463, %v1090
        %1478 = vst [vmem:[#allocation3] sm:$0xf] %v1477
        %1479 = vst [vmem:[#allocation3 + $0x4] sm:$0xf] %v1472
        %v1480 = vld [vmem:[#allocation3 + $0x8] sm:$0x1]
        %v1481 = vsel %vm336, %v1473, %v1480
        %1482 = vst [vmem:[#allocation3 + $0x8] sm:$0x1] %v1481
        %v1483 = vld [vmem:[#allocation3] sm:$0xf]
        %v1484 = vld [vmem:[#allocation3 + $0x4] sm:$0xf]
        %v1485 = vld [vmem:[#allocation12] sm:$0xf]
        %v1486 = vld [vmem:[#allocation12 + $0x4] sm:$0xf]
        %v1487 = vld [vmem:[#allocation12 + $0x8] sm:$0xf]
        %v1488 = vld [vmem:[#allocation12 + $0xc] sm:$0xf]
        %v1489 = vld [vmem:[#allocation12 + $0x10] sm:$0xf]
        %v1490 = vld [vmem:[#allocation12 + $0x14] sm:$0xf]
        %v1491 = vld [vmem:[#allocation12 + $0x18] sm:$0xf]
        %v1492 = vld [vmem:[#allocation12 + $0x1c] sm:$0xf]
        %v1493 = vld [vmem:[#allocation12 + $0x20] sm:$0xf]
        %v1494 = vld [vmem:[#allocation12 + $0x24] sm:$0xf]
        %v1495 = vld [vmem:[#allocation12 + $0x28] sm:$0xf]
        %v1496 = vld [vmem:[#allocation12 + $0x2c] sm:$0xf]
        %v1497 = vld [vmem:[#allocation12 + $0x30] sm:$0xf]
        %v1498 = vld [vmem:[#allocation12 + $0x34] sm:$0xf]
        %v1499 = vld [vmem:[#allocation12 + $0x38] sm:$0xf]
        %v1500 = vld [vmem:[#allocation12 + $0x3c] sm:$0xf]
        %v1501 = vld [vmem:[#allocation3 + $0x8] sm:$0x1]
        %s1502 = scalar_lea.vmem [#allocation12], 64
        %v1503 = vld [vmem:[%s1502] sm:$0xf]
        %v1504 = vld [vmem:[%s1502 + $0x4] sm:$0xf]
        %v1505 = vld [vmem:[%s1502 + $0x8] sm:$0xf]
        %v1506 = vld [vmem:[%s1502 + $0xc] sm:$0xf]
        %v1507 = vld [vmem:[%s1502 + $0x10] sm:$0xf]
        %v1508 = vld [vmem:[%s1502 + $0x14] sm:$0xf]
        %v1509 = vld [vmem:[%s1502 + $0x18] sm:$0xf]
        %v1510 = vld [vmem:[%s1502 + $0x1c] sm:$0xf]
        %v1511 = vld [vmem:[%s1502 + $0x20] sm:$0xf]
        %v1512 = vld [vmem:[%s1502 + $0x24] sm:$0xf]
        %v1513 = vld [vmem:[%s1502 + $0x28] sm:$0xf]
        %v1514 = vld [vmem:[%s1502 + $0x2c] sm:$0xf]
        %v1515 = vld [vmem:[%s1502 + $0x30] sm:$0xf]
        %v1516 = vld [vmem:[%s1502 + $0x34] sm:$0xf]
        %v1517 = vld [vmem:[%s1502 + $0x38] sm:$0xf]
        %v1518 = vld [vmem:[%s1502 + $0x3c] sm:$0xf]
        %v1522 = vunpack.c.l.b16 %v1483
        %v1523 = vunpack.c.l.b16 %v1484
        %v1524 = vunpack.c.l.b16 %v1501
        %v1525 = vpack.c.b16 %v1523, %v1522
        %v1526 = vpack.c.b16 %v1524, %v1524
        %v1528 = vshrl.u32 %v1525, 16
        %v1530 = vshll.u32 %v1525, 16
        %v1532 = vrot.slane %v1530, 1
        %v1533 = vor.u32 %v1528, %v1532
        %v1535 = vshll.u32 %v1526, 16
        %v1537 = vrot.slane %v1535, 1
        %v1538 = vsel %vm417, %v1533, %v1537
        %v1556 = vunpack.c.l.b16 %v1503
        %v1557 = vunpack.c.l.b16 %v1504
        %v1558 = vunpack.c.l.b16 %v1505
        %v1559 = vunpack.c.l.b16 %v1506
        %v1560 = vunpack.c.l.b16 %v1507
        %v1561 = vunpack.c.l.b16 %v1508
        %v1562 = vunpack.c.l.b16 %v1509
        %v1563 = vunpack.c.l.b16 %v1510
        %v1564 = vunpack.c.l.b16 %v1511
        %v1565 = vunpack.c.l.b16 %v1512
        %v1566 = vunpack.c.l.b16 %v1513
        %v1567 = vunpack.c.l.b16 %v1514
        %v1568 = vunpack.c.l.b16 %v1515
        %v1569 = vunpack.c.l.b16 %v1516
        %v1570 = vunpack.c.l.b16 %v1517
        %v1571 = vunpack.c.l.b16 %v1518
        %v1572 = vpack.c.b16 %v1557, %v1556
        %v1573 = vpack.c.b16 %v1559, %v1558
        %v1574 = vpack.c.b16 %v1561, %v1560
        %v1575 = vpack.c.b16 %v1563, %v1562
        %v1576 = vpack.c.b16 %v1565, %v1564
        %v1577 = vpack.c.b16 %v1567, %v1566
        %v1578 = vpack.c.b16 %v1569, %v1568
        %v1579 = vpack.c.b16 %v1571, %v1570
        %1588 = vmatprep.subr.bf16.mxu0 0
        %1589 = vmatpush1.bf16.msra.mxu0 %v1572
        %1590 = vmatprep.subr.bf16.mxu0 0
        %1591 = vmatpush1.bf16.msra.mxu0 %v1573
        %1592 = vmatprep.subr.bf16.mxu0 0
        %1593 = vmatpush1.bf16.msra.mxu0 %v1574
        %1594 = vmatprep.subr.bf16.mxu0 0
        %1595 = vmatpush1.bf16.msra.mxu0 %v1575
        %1596 = vmatprep.subr.bf16.mxu0 0
        %1597 = vmatpush1.bf16.msra.mxu0 %v1576
        %1598 = vmatprep.subr.bf16.mxu0 0
        %1599 = vmatpush1.bf16.msra.mxu0 %v1577
        %1600 = vmatprep.subr.bf16.mxu0 0
        %1601 = vmatpush1.bf16.msra.mxu0 %v1578
        %1602 = vmatprep.subr.bf16.mxu0 0
        %1603 = vmatpush1.bf16.msra.mxu0 %v1579
        %1604 = vmatprep.subr.bf16.mxu0 0
        %1605 = vmatpush1.bf16.msra.mxu0 0
        %1606 = vmatprep.subr.bf16.mxu0 0
        %1607 = vmatpush1.bf16.msra.mxu0 0
        %1608 = vmatprep.subr.bf16.mxu0 0
        %1609 = vmatpush1.bf16.msra.mxu0 0
        %1610 = vmatprep.subr.bf16.mxu0 0
        %1611 = vmatpush1.bf16.msra.mxu0 0
        %1612 = vmatprep.subr.bf16.mxu0 0
        %1613 = vmatpush1.bf16.msra.mxu0 0
        %1614 = vmatprep.subr.bf16.mxu0 0
        %1615 = vmatpush1.bf16.msra.mxu0 0
        %1616 = vmatprep.subr.bf16.mxu0 0
        %1617 = vmatpush1.bf16.msra.mxu0 0
        %1618 = vmatprep.subr.bf16.mxu0 0
        %1619 = vmatpush1.bf16.msra.mxu0 0
        %1620 = vmatprep.mubr.bf16.mxu0 0
        %1621 = vmatmul.mubr.bf16.gmra.mrb[0].mxu0 %v1538
        %v1622 = vpop.f32.mrb[0].mxu0
        %v1623 = vadd.f32 0.0, %v1622
        %v1624 = vpop.f32.mrb[0].mxu0
        %v1625 = vpop.f32.mrb[0].mxu0
        %v1626 = vadd.f32 0.0, %v1625
        %v1627 = vpop.f32.mrb[0].mxu0
        %1628 = vdwg.mxu0
        %v1646 = vunpack.c.l.b16 %v1485
        %v1647 = vunpack.c.l.b16 %v1486
        %v1648 = vunpack.c.l.b16 %v1487
        %v1649 = vunpack.c.l.b16 %v1488
        %v1650 = vunpack.c.l.b16 %v1489
        %v1651 = vunpack.c.l.b16 %v1490
        %v1652 = vunpack.c.l.b16 %v1491
        %v1653 = vunpack.c.l.b16 %v1492
        %v1654 = vunpack.c.l.b16 %v1493
        %v1655 = vunpack.c.l.b16 %v1494
        %v1656 = vunpack.c.l.b16 %v1495
        %v1657 = vunpack.c.l.b16 %v1496
        %v1658 = vunpack.c.l.b16 %v1497
        %v1659 = vunpack.c.l.b16 %v1498
        %v1660 = vunpack.c.l.b16 %v1499
        %v1661 = vunpack.c.l.b16 %v1500
        %v1662 = vpack.c.b16 %v1647, %v1646
        %v1663 = vpack.c.b16 %v1649, %v1648
        %v1664 = vpack.c.b16 %v1651, %v1650
        %v1665 = vpack.c.b16 %v1653, %v1652
        %v1666 = vpack.c.b16 %v1655, %v1654
        %v1667 = vpack.c.b16 %v1657, %v1656
        %v1668 = vpack.c.b16 %v1659, %v1658
        %v1669 = vpack.c.b16 %v1661, %v1660
        %1678 = vmatprep.subr.bf16.mxu0 0
        %1679 = vmatpush1.bf16.msra.mxu0 %v1662
        %1680 = vmatprep.subr.bf16.mxu0 0
        %1681 = vmatpush1.bf16.msra.mxu0 %v1663
        %1682 = vmatprep.subr.bf16.mxu0 0
        %1683 = vmatpush1.bf16.msra.mxu0 %v1664
        %1684 = vmatprep.subr.bf16.mxu0 0
        %1685 = vmatpush1.bf16.msra.mxu0 %v1665
        %1686 = vmatprep.subr.bf16.mxu0 0
        %1687 = vmatpush1.bf16.msra.mxu0 %v1666
        %1688 = vmatprep.subr.bf16.mxu0 0
        %1689 = vmatpush1.bf16.msra.mxu0 %v1667
        %1690 = vmatprep.subr.bf16.mxu0 0
        %1691 = vmatpush1.bf16.msra.mxu0 %v1668
        %1692 = vmatprep.subr.bf16.mxu0 0
        %1693 = vmatpush1.bf16.msra.mxu0 %v1669
        %1694 = vmatprep.subr.bf16.mxu0 0
        %1695 = vmatpush1.bf16.msra.mxu0 0
        %1696 = vmatprep.subr.bf16.mxu0 0
        %1697 = vmatpush1.bf16.msra.mxu0 0
        %1698 = vmatprep.subr.bf16.mxu0 0
        %1699 = vmatpush1.bf16.msra.mxu0 0
        %1700 = vmatprep.subr.bf16.mxu0 0
        %1701 = vmatpush1.bf16.msra.mxu0 0
        %1702 = vmatprep.subr.bf16.mxu0 0
        %1703 = vmatpush1.bf16.msra.mxu0 0
        %1704 = vmatprep.subr.bf16.mxu0 0
        %1705 = vmatpush1.bf16.msra.mxu0 0
        %1706 = vmatprep.subr.bf16.mxu0 0
        %1707 = vmatpush1.bf16.msra.mxu0 0
        %1708 = vmatprep.subr.bf16.mxu0 0
        %1709 = vmatpush1.bf16.msra.mxu0 0
        %1710 = vmatprep.mubr.bf16.mxu0 0
        %1711 = vmatmul.mubr.bf16.gmra.mrb[0].mxu0 %v1525
        %v1712 = vpop.f32.mrb[0].mxu0
        %v1713 = vadd.f32 %v1623, %v1712
        %v1714 = vpop.f32.mrb[0].mxu0
        %v1715 = vpop.f32.mrb[0].mxu0
        %v1716 = vadd.f32 %v1626, %v1715
        %v1717 = vpop.f32.mrb[0].mxu0
        %1718 = vdwg.mxu0
        %v1719 = vld [vmem:[#allocation3] sm:$0xe]
        %s1720 = scalar_lea.vmem [#allocation12], 128
        %v1721 = vld [vmem:[%s1720] sm:$0xf]
        %v1722 = vld [vmem:[%s1720 + $0x4] sm:$0xf]
        %v1723 = vld [vmem:[%s1720 + $0x8] sm:$0xf]
        %v1724 = vld [vmem:[%s1720 + $0xc] sm:$0xf]
        %v1725 = vld [vmem:[%s1720 + $0x10] sm:$0xf]
        %v1726 = vld [vmem:[%s1720 + $0x14] sm:$0xf]
        %v1727 = vld [vmem:[%s1720 + $0x18] sm:$0xf]
        %v1728 = vld [vmem:[%s1720 + $0x1c] sm:$0xf]
        %v1729 = vld [vmem:[%s1720 + $0x20] sm:$0xf]
        %v1730 = vld [vmem:[%s1720 + $0x24] sm:$0xf]
        %v1731 = vld [vmem:[%s1720 + $0x28] sm:$0xf]
        %v1732 = vld [vmem:[%s1720 + $0x2c] sm:$0xf]
        %v1733 = vld [vmem:[%s1720 + $0x30] sm:$0xf]
        %v1734 = vld [vmem:[%s1720 + $0x34] sm:$0xf]
        %v1735 = vld [vmem:[%s1720 + $0x38] sm:$0xf]
        %v1736 = vld [vmem:[%s1720 + $0x3c] sm:$0xf]
        %v1738 = vunpack.c.l.b16 %v1719
        %v1739 = vpack.c.b16 %v1523, %v1738
        %v1740 = vrot.slane %v1739, 1
        %v1741 = vrot.slane %v1526, 1
        %v1742 = vsel %vm579, %v1740, %v1741
        %v1760 = vunpack.c.l.b16 %v1721
        %v1761 = vunpack.c.l.b16 %v1722
        %v1762 = vunpack.c.l.b16 %v1723
        %v1763 = vunpack.c.l.b16 %v1724
        %v1764 = vunpack.c.l.b16 %v1725
        %v1765 = vunpack.c.l.b16 %v1726
        %v1766 = vunpack.c.l.b16 %v1727
        %v1767 = vunpack.c.l.b16 %v1728
        %v1768 = vunpack.c.l.b16 %v1729
        %v1769 = vunpack.c.l.b16 %v1730
        %v1770 = vunpack.c.l.b16 %v1731
        %v1771 = vunpack.c.l.b16 %v1732
        %v1772 = vunpack.c.l.b16 %v1733
        %v1773 = vunpack.c.l.b16 %v1734
        %v1774 = vunpack.c.l.b16 %v1735
        %v1775 = vunpack.c.l.b16 %v1736
        %v1776 = vpack.c.b16 %v1761, %v1760
        %v1777 = vpack.c.b16 %v1763, %v1762
        %v1778 = vpack.c.b16 %v1765, %v1764
        %v1779 = vpack.c.b16 %v1767, %v1766
        %v1780 = vpack.c.b16 %v1769, %v1768
        %v1781 = vpack.c.b16 %v1771, %v1770
        %v1782 = vpack.c.b16 %v1773, %v1772
        %v1783 = vpack.c.b16 %v1775, %v1774
        %1792 = vmatprep.subr.bf16.mxu0 0
        %1793 = vmatpush1.bf16.msra.mxu0 %v1776
        %1794 = vmatprep.subr.bf16.mxu0 0
        %1795 = vmatpush1.bf16.msra.mxu0 %v1777
        %1796 = vmatprep.subr.bf16.mxu0 0
        %1797 = vmatpush1.bf16.msra.mxu0 %v1778
        %1798 = vmatprep.subr.bf16.mxu0 0
        %1799 = vmatpush1.bf16.msra.mxu0 %v1779
        %1800 = vmatprep.subr.bf16.mxu0 0
        %1801 = vmatpush1.bf16.msra.mxu0 %v1780
        %1802 = vmatprep.subr.bf16.mxu0 0
        %1803 = vmatpush1.bf16.msra.mxu0 %v1781
        %1804 = vmatprep.subr.bf16.mxu0 0
        %1805 = vmatpush1.bf16.msra.mxu0 %v1782
        %1806 = vmatprep.subr.bf16.mxu0 0
        %1807 = vmatpush1.bf16.msra.mxu0 %v1783
        %1808 = vmatprep.subr.bf16.mxu0 0
        %1809 = vmatpush1.bf16.msra.mxu0 0
        %1810 = vmatprep.subr.bf16.mxu0 0
        %1811 = vmatpush1.bf16.msra.mxu0 0
        %1812 = vmatprep.subr.bf16.mxu0 0
        %1813 = vmatpush1.bf16.msra.mxu0 0
        %1814 = vmatprep.subr.bf16.mxu0 0
        %1815 = vmatpush1.bf16.msra.mxu0 0
        %1816 = vmatprep.subr.bf16.mxu0 0
        %1817 = vmatpush1.bf16.msra.mxu0 0
        %1818 = vmatprep.subr.bf16.mxu0 0
        %1819 = vmatpush1.bf16.msra.mxu0 0
        %1820 = vmatprep.subr.bf16.mxu0 0
        %1821 = vmatpush1.bf16.msra.mxu0 0
        %1822 = vmatprep.subr.bf16.mxu0 0
        %1823 = vmatpush1.bf16.msra.mxu0 0
        %1824 = vmatprep.mubr.bf16.mxu0 0
        %1825 = vmatmul.mubr.bf16.gmra.mrb[0].mxu0 %v1742
        %v1826 = vpop.f32.mrb[0].mxu0
        %v1827 = vadd.f32 0.0, %v1826
        %v1828 = vpop.f32.mrb[0].mxu0
        %v1829 = vpop.f32.mrb[0].mxu0
        %v1830 = vadd.f32 0.0, %v1829
        %v1831 = vpop.f32.mrb[0].mxu0
        %1832 = vdwg.mxu0
        %v1833 = vadd.f32 %v1713, %v1827
        %v1834 = vadd.f32 %v1716, %v1830
        %v1835 = vld [vmem:[%s5 + $0x3] sm:$0x1]
        %v1836 = vlaneseq
        %v1837 = vshrl.u32 %v1836, 7
        %v1838 = vsub.s32 0, %v1837
        %v1839 = vrot.slane %v1835, %v1838
        %v1840 = vadd.f32 %v1833, %v1839
        %v1841 = vadd.f32 %v1834, %v1839
        %v1842 = vmax.f32 %v1840, 0.0
        %v1843 = vmax.f32 %v1841, 0.0
        %1844 = vst [vmem:[%s327] sm:$0xff] %v1842
        %1845 = vst [vmem:[%s327 + $0x8] sm:$0xff] %v1843
        %s1846 = sand.u32 %s164, 1
        %s1847 = scalar_lea.sflag [#allocation6], %s1846
        %s1848 = sand.u32 %s164, 1
        %s1849 = smul.addr %s1848, 16
        %s1850 = scalar_lea.vmem [#allocation13], %s1849
        // Predicated region
        $region65: #{tpu_custom_call.1} parent=43 // pred_check
          %p1851 = pneg %p174
        $region66: #{tpu_custom_call.1} parent=43 // pred_check_branch
          %1853 = sbr.rel (%p1851) target = $region68
        $region67: #{tpu_custom_call.1} parent=43 // pred_region
          %s1855 = ssub.s32 256, 256
          %1856 = vsyncadd %s1847, %s1855
          %s1857 = smul.addr %s25, 2
          %s1858 = smul.addr %s1857, 128
          %s1859 = scalar_lea.hbm %s6, %s1858
          %s1860 = sshll.u32 %s1850, 4
          %s1861 = int_to_ptr.vmem [resolvable:$true] %s1860
          %1866 = dma.vmem_to_hbm [thread:$0]  %s1861, 256, %s1859, %s1847, 128, 128, 8
        $region68: #{tpu_custom_call.1} parent=43 // pred_fallthru
          _
      $region44: #{tpu_custom_call.1} parent=5 // pred_fallthru
        _
      %p1867 = scmp.le.s32.totalorder 2, %s20
      // Predicated region
      $region69: #{tpu_custom_call.1} parent=5 // pred_check
        %p1868 = pneg %p1867
      $region70: #{tpu_custom_call.1} parent=5 // pred_check_branch
        %1870 = sbr.rel (%p1868) target = $region72
      $region71: #{tpu_custom_call.1} parent=5 // pred_region
        %s1871 = ssub.s32 %s20, 2
        // Predicated region
        $region73: #{tpu_custom_call.1} parent=71 // pred_check
          %p1872 = pneg %p180
        $region74: #{tpu_custom_call.1} parent=71 // pred_check_branch
          %1874 = sbr.rel (%p1872) target = $region76
        $region75: #{tpu_custom_call.1} parent=71 // pred_region
          %s1875 = sand.u32 %s165, 1
          %s1876 = scalar_lea.sflag [#allocation6], %s1875
          %s1877 = sand.u32 %s165, 1
          %s1878 = smul.addr %s1877, 16
          %s1879 = scalar_lea.vmem [#allocation13], %s1878
          %1880 = dma.done %s1876, 256
        $region76: #{tpu_custom_call.1} parent=71 // pred_fallthru
          _
      $region72: #{tpu_custom_call.1} parent=5 // pred_fallthru
        _
    $region6: #{tpu_custom_call.1} parent=1 // loop_footer
      %s24 = sadd.s32 1, %s20
    $region7: #{tpu_custom_call.1} parent=1 // loop_footer_branch
      %19 = sbr.rel target = $region3
    $region8: #{tpu_custom_call.1} parent=1 // loop_exit
      _
    %1881 = vsyncpa [#allocation5], 1
    %s1882 = scalar_lea.sflag [#allocation5], 1
    %1883 = vsyncpa %s1882, 1
    %1884 = vsyncpa [#allocation8], 1
    %1885 = vsyncpa [#allocation11], 1
    %1886 = vsyncpa [#allocation6], 1
    %s1887 = scalar_lea.sflag [#allocation6], 1
    %1888 = vsyncpa %s1887, 1

</llo_original>
